<compile_context>
chip_gen: v7x
topology: tpu7x:2x2x1
jax: 0.10.0
libtpu: 0.0.40
codegen_flags: <defaults>
</compile_context>

<pallas_src>
import functools

import jax
import jax.numpy as jnp
import numpy as np
from jax.experimental import pallas as pl
from jax.experimental.pallas import tpu as pltpu


def _round_up(x, m):
    return ((x + m - 1) // m) * m


# ----------------------------------------------------------------------------
# Fused kernel: one (batch, H-strip, C-tile) step of
#   pointwise 1x1 conv + BN  ->  depthwise KxK conv + BN + ReLU
# ----------------------------------------------------------------------------
def _fused_kernel(x_ref, w1_ref, b1_ref, w2_ref, b2_ref, o_ref, *y1s_refs,
                  H, W, K, pad, sh, w_al, hs_axis, bot_max):
    rows, wa, cin = x_ref.shape          # rows = sh + 2*pad, wa = padded width
    tc = o_ref.shape[-1]                 # channel tile (multiple of 128)
    hs = pl.program_id(hs_axis)          # H-strip index

    # ---- Stage 1: pointwise conv (BN1 scale folded into w1) + bias --------
    x2d = x_ref[...].reshape(rows * wa, cin)
    y1 = jnp.dot(x2d, w1_ref[...], preferred_element_type=jnp.float32)
    y1 = (y1 + b1_ref[...]).reshape(rows, wa, tc)

    # K width-pre-shifted copies of y1 (copy kw holds y1 columns
    # [kw, kw + w_al)), so the depthwise tap loop below only does
    # sublane-aligned reads.  The single misaligned relayout per kw happens
    # here, once per strip, instead of once per tap.
    for kw in range(K):
        y1s_refs[kw][...] = y1[:, kw:kw + w_al, :].astype(y1s_refs[kw].dtype)

    # ---- Zero-padding fixups (thin slabs / runtime-gated, no full mask) ----
    zdt = y1s_refs[0].dtype
    # Columns that correspond to conv2's zero padding in width (static).
    for kw in range(K):
        left = pad - kw
        if left > 0:
            y1s_refs[kw][:, 0:left, :] = jnp.zeros((rows, left, tc), zdt)
        rstart = max(0, pad + W - kw)
        rwidth = w_al - rstart
        if rwidth > 0:
            y1s_refs[kw][:, rstart:w_al, :] = jnp.zeros((rows, rwidth, tc), zdt)

    # Rows above the image: only the first H-strip ever touches them.
    if pad > 0:
        @pl.when(hs == 0)
        def _():
            for kw in range(K):
                y1s_refs[kw][0:pad] = jnp.zeros((pad, w_al, tc), zdt)

    # Rows at/below the image bottom: only strips whose window passes row H-1.
    if bot_max > 0:
        @pl.when((hs + 1) * sh + pad > H)
        def _():
            base = rows - bot_max
            rid = (jax.lax.broadcasted_iota(jnp.int32, (bot_max, 1, 1), 0)
                   + base + hs * sh - pad)          # true image row
            keep = rid < H
            for kw in range(K):
                slab = y1s_refs[kw][base:rows]
                y1s_refs[kw][base:rows] = jnp.where(keep, slab,
                                                    jnp.zeros_like(slab))

    # ---- Stage 2: depthwise KxK conv (BN2 scale folded) + bias + ReLU -----
    w2 = w2_ref[...]                      # (K*K, tc)
    b2 = b2_ref[...]                      # (1, tc)
    acc = None
    for kh in range(K):
        for kw in range(K):
            tap = (y1s_refs[kw][kh:kh + sh].astype(jnp.float32)
                   * w2[kh * K + kw])
            acc = tap if acc is None else acc + tap
    o_ref[...] = jnp.maximum(acc + b2, 0.0).astype(o_ref.dtype)


# ----------------------------------------------------------------------------
# Wrapper: NCHW interface, internal NHWC, lane/sublane-dense padded tiles,
# overlapping H-strips (halo) built once on the small Cin-sized input.
# ----------------------------------------------------------------------------
def light_conv_bn_act(x_nchw, params, *, kernel_size, strip_rows=32,
                      tile_c=256, y1_dtype=jnp.float32, out_layout="NCHW",
                      vmem_budget_bytes=40 * 1024 * 1024):
    N, Cin, H, W = (int(d) for d in x_nchw.shape)
    K = int(kernel_size)
    pad = (K - 1) // 2

    w1 = params["w1_mat"]                 # (Cin, Cout), BN1 scale folded in
    w2 = params["w2_dw"]                  # (K, K, Cout), BN2 scale folded in
    Cout = int(w1.shape[1])

    # Channel / width padding.  Cin only needs a multiple of 8 (the block's
    # minor dim equals the full array dim), so tiny-Cin layers don't inflate
    # HBM traffic; Cout stays a multiple of 128 for lane-dense MXU / stores.
    cin_p = _round_up(Cin, 8)
    cout_128 = _round_up(Cout, 128)
    w_al = _round_up(W, 8)                 # sublane-dense output width
    wa = _round_up(w_al + 2 * pad, 8)      # y1 / input width incl. halo
    y1_isize = jnp.dtype(y1_dtype).itemsize

    # ---- tile selection (biggest strip that fits the VMEM budget) ---------
    sh = max(1, pad, min(strip_rows, H))
    if N == 1 and -(-H // sh) < 2 and H > 1:
        # keep >= 2 parallel grid steps at batch 1 (v7x has 2 TensorCores)
        sh = max(1, pad, -(-H // 2))
    tc = min(_round_up(tile_c, 128), cout_128)

    def geometry(sh, tc):
        n_hs = -(-H // sh)
        rows = sh + 2 * pad
        cout_p = _round_up(cout_128, tc)
        n_ct = cout_p // tc

        def vbytes(shape, isize=4):
            lead = int(np.prod(shape[:-2], dtype=np.int64)) if len(shape) > 2 else 1
            return lead * _round_up(shape[-2], 8) * _round_up(shape[-1], 128) * isize

        est = (2 * vbytes((rows, wa, cin_p))                       # x block (dbl-buf)
               + 2 * (vbytes((cin_p, tc)) + vbytes((K * K, tc))
                      + 2 * vbytes((1, tc)))                       # weights / biases
               + 2 * vbytes((sh, w_al, tc))                        # out block
               + K * vbytes((rows, w_al, tc), y1_isize))           # y1 scratch
        return n_hs, rows, cout_p, n_ct, est

    while True:
        n_hs, rows, cout_p, n_ct, est = geometry(sh, tc)
        if est <= vmem_budget_bytes or (sh <= 8 and tc <= 128):
            break
        if sh > 8:
            sh = max(8, sh // 2)
        else:
            tc = max(128, tc // 2)

    h_pad = n_hs * sh
    bot_max = max(0, min(rows, rows - (H + pad - (n_hs - 1) * sh)))
    vmem_limit = int(min(max(est + (4 << 20), 16 << 20), 64 << 20))

    # Grid-axis order: keep resident whichever stream is bigger per step.
    strip_bytes = rows * wa * cin_p * 4
    wtile_bytes = (cin_p + K * K + 2) * tc * 4
    ct_inner = (n_ct == 1 or
                n_ct * wtile_bytes * (n_hs - 1) <= n_hs * strip_bytes * (n_ct - 1))
    hs_axis = 1 if ct_inner else 2

    # ---- data prep (one small pass over the Cin-sized input only) ---------
    x = jnp.transpose(x_nchw, (0, 2, 3, 1)).astype(jnp.float32)    # NHWC
    x = jnp.pad(x, ((0, 0),
                    (pad, h_pad - H + pad),
                    (pad, wa - W - pad),
                    (0, cin_p - Cin)))
    # Overlapping H strips: strip s holds padded rows [s*sh, s*sh + rows).
    strip_idx = jnp.arange(n_hs)[:, None] * sh + jnp.arange(rows)[None, :]
    x_strips = x[:, strip_idx]                 # (N, n_hs, rows, wa, cin_p)

    # Pad folded weights / biases to the padded channel counts.
    w1p = jnp.pad(w1.astype(jnp.float32), ((0, cin_p - Cin), (0, cout_p - Cout)))
    b1p = jnp.pad(params["bias1"].astype(jnp.float32), ((0, 0), (0, cout_p - Cout)))
    w2p = jnp.pad(w2.astype(jnp.float32),
                  ((0, 0), (0, 0), (0, cout_p - Cout))).reshape(K * K, cout_p)
    b2p = jnp.pad(params["bias2"].astype(jnp.float32), ((0, 0), (0, cout_p - Cout)))

    if ct_inner:
        grid = (N, n_hs, n_ct)
        x_map = lambda n, s, c: (n, s, 0, 0, 0)
        w_map = lambda n, s, c: (0, c)
        o_map = lambda n, s, c: (n, s, 0, c)
    else:
        grid = (N, n_ct, n_hs)
        x_map = lambda n, c, s: (n, s, 0, 0, 0)
        w_map = lambda n, c, s: (0, c)
        o_map = lambda n, c, s: (n, s, 0, c)

    kern = functools.partial(_fused_kernel, H=H, W=W, K=K, pad=pad, sh=sh,
                             w_al=w_al, hs_axis=hs_axis, bot_max=bot_max)

    out = pl.pallas_call(
        kern,
        out_shape=jax.ShapeDtypeStruct((N, h_pad, w_al, cout_p), jnp.float32),
        grid_spec=pltpu.PrefetchScalarGridSpec(
            num_scalar_prefetch=0,
            grid=grid,
            in_specs=[
                pl.BlockSpec((None, None, rows, wa, cin_p), x_map),
                pl.BlockSpec((cin_p, tc), w_map),
                pl.BlockSpec((1, tc), w_map),
                pl.BlockSpec((K * K, tc), w_map),
                pl.BlockSpec((1, tc), w_map),
            ],
            out_specs=pl.BlockSpec((None, sh, w_al, tc), o_map),
            scratch_shapes=[pltpu.VMEM((rows, w_al, tc), y1_dtype)
                            for _ in range(K)],
        ),
        compiler_params=pltpu.CompilerParams(
            dimension_semantics=("parallel", "parallel", "parallel"),
            vmem_limit_bytes=vmem_limit),
    )(x_strips, w1p, b1p, w2p, b2p)

    out = out[:, :H, :W, :Cout]                 # drop H / W / channel padding
    if out_layout == "NHWC":
        return out
    return jnp.transpose(out, (0, 3, 1, 2))     # NHWC -> NCHW


# ----------------------------------------------------------------------------
# Parameter setup (deterministic, matching the PyTorch module's shapes).
# BN is folded for inference; its scale factors are folded into the weights.
# ----------------------------------------------------------------------------
def make_params(key, in_channels, out_channels, kernel_size):
    ks = jax.random.split(key, 8)
    eps = 1e-5
    # conv1: 1x1 pointwise, bias=False -> weight (Cout, Cin, 1, 1)
    w1 = jax.random.normal(ks[0], (out_channels, in_channels, 1, 1),
                           jnp.float32) * 0.1
    g1 = 1.0 + 0.1 * jax.random.normal(ks[1], (out_channels,), jnp.float32)
    b1 = 0.1 * jax.random.normal(ks[2], (out_channels,), jnp.float32)
    m1 = 0.1 * jax.random.normal(ks[3], (out_channels,), jnp.float32)
    v1 = jnp.abs(jax.random.normal(ks[4], (out_channels,), jnp.float32)) + 0.5
    # conv2: depthwise KxK, groups=Cout -> weight (Cout, 1, K, K)
    w2 = jax.random.normal(ks[5], (out_channels, 1, kernel_size, kernel_size),
                           jnp.float32) * 0.1
    g2 = 1.0 + 0.1 * jax.random.normal(ks[6], (out_channels,), jnp.float32)
    b2 = 0.1 * jax.random.normal(ks[7], (out_channels,), jnp.float32)
    m2 = jnp.zeros((out_channels,), jnp.float32)
    v2 = jnp.ones((out_channels,), jnp.float32)

    s1 = g1 / jnp.sqrt(v1 + eps)
    sb1 = b1 - m1 * s1
    s2 = g2 / jnp.sqrt(v2 + eps)
    sb2 = b2 - m2 * s2
    return dict(
        # kernel-side parameters (BN scales folded into the conv weights)
        w1_mat=jnp.transpose(w1[:, :, 0, 0]) * s1[None, :],                  # (Cin, Cout)
        bias1=sb1.reshape(1, -1),
        w2_dw=jnp.transpose(w2[:, 0, :, :], (1, 2, 0)) * s2[None, None, :],  # (K, K, Cout)
        bias2=sb2.reshape(1, -1),
        # reference-side (unfolded) parameters
        scale1=s1, scale2=s2,
        raw=dict(w1=w1, w2=w2),
    )


# ----------------------------------------------------------------------------
# Pure-JAX reference (same folded-BN inference semantics) for verification.
# ----------------------------------------------------------------------------
def reference(x_nchw, params, *, kernel_size):
    w1 = params["raw"]["w1"]
    w2 = params["raw"]["w2"]
    Cout = w1.shape[0]
    pad = (kernel_size - 1) // 2
    y = jax.lax.conv_general_dilated(
        x_nchw, w1, window_strides=(1, 1), padding="VALID",
        dimension_numbers=("NCHW", "OIHW", "NCHW"))
    y = y * params["scale1"].reshape(1, Cout, 1, 1) \
        + params["bias1"].reshape(1, Cout, 1, 1)
    y = jax.lax.conv_general_dilated(
        y, w2, window_strides=(1, 1), padding=[(pad, pad), (pad, pad)],
        dimension_numbers=("NCHW", "OIHW", "NCHW"),
        feature_group_count=Cout)
    y = y * params["scale2"].reshape(1, Cout, 1, 1) \
        + params["bias2"].reshape(1, Cout, 1, 1)
    return jnp.maximum(y, 0.0)


if __name__ == "__main__":
    key = jax.random.PRNGKey(0)
    kx, kp = jax.random.split(key)

    N, Cin, Cout, H, W, K = 2, 4, 8, 16, 16, 3
    x = jax.random.normal(kx, (N, Cin, H, W), jnp.float32)
    params = make_params(kp, Cin, Cout, K)

    fwd = jax.jit(functools.partial(light_conv_bn_act, kernel_size=K))
    out = jax.block_until_ready(fwd(x, params))

    ref = jax.block_until_ready(reference(x, params, kernel_size=K))
    np.testing.assert_allclose(np.asarray(out), np.asarray(ref),
                               rtol=2e-5, atol=2e-5)
    print("KERNEL_OK")
</pallas_src>

<mosaic_0001>
module attributes {stable_mosaic.version = 11 : i64} {
  func.func @_fused_kernel(%arg0: i32, %arg1: i32, %arg2: i32, %arg3: memref<1x1x18x24x8xf32, #tpu.memory_space<vmem>>, %arg4: memref<8x128xf32, #tpu.memory_space<vmem>>, %arg5: memref<1x128xf32, #tpu.memory_space<vmem>>, %arg6: memref<9x128xf32, #tpu.memory_space<vmem>>, %arg7: memref<1x128xf32, #tpu.memory_space<vmem>>, %arg8: memref<1x16x16x128xf32, #tpu.memory_space<vmem>>, %arg9: memref<18x16x128xf32, #tpu.memory_space<vmem>>, %arg10: memref<18x16x128xf32, #tpu.memory_space<vmem>>, %arg11: memref<18x16x128xf32, #tpu.memory_space<vmem>>) attributes {dimension_semantics = [#tpu.dimension_semantics<parallel>, #tpu.dimension_semantics<parallel>, #tpu.dimension_semantics<parallel>], iteration_bounds = array<i64: 2, 1, 1>, scalar_prefetch = 0 : i64, scratch_operands = 3 : i64, tpu.core_type = #tpu.core_type<tc>, window_params = [{transform_indices = @transform_0, window_bounds = array<i64: 1, 1, 18, 24, 8>}, {transform_indices = @transform_1, window_bounds = array<i64: 8, 128>}, {transform_indices = @transform_2, window_bounds = array<i64: 1, 128>}, {transform_indices = @transform_3, window_bounds = array<i64: 9, 128>}, {transform_indices = @transform_4, window_bounds = array<i64: 1, 128>}, {transform_indices = @transform_5, window_bounds = array<i64: 1, 16, 16, 128>}]} {
    %c0 = arith.constant 0 : index
    %c0_0 = arith.constant 0 : index
    %c0_1 = arith.constant 0 : index
    %c0_2 = arith.constant 0 : index
    %c0_3 = arith.constant 0 : index
    %0 = vector.load %arg3[%c0, %c0_0, %c0_1, %c0_2, %c0_3] : memref<1x1x18x24x8xf32, #tpu.memory_space<vmem>>, vector<1x1x18x24x8xf32>
    %1 = vector.shape_cast %0 : vector<1x1x18x24x8xf32> to vector<18x24x8xf32>
    %2 = vector.shape_cast %1 : vector<18x24x8xf32> to vector<432x8xf32>
    %c0_4 = arith.constant 0 : index
    %c0_5 = arith.constant 0 : index
    %3 = vector.load %arg4[%c0_4, %c0_5] : memref<8x128xf32, #tpu.memory_space<vmem>>, vector<8x128xf32>
    %cst = arith.constant dense<0.000000e+00> : vector<432x128xf32>
    %4 = tpu.matmul %2, %3, %cst {dimension_numbers = #tpu.dot_dimension_numbers<[1], [0], [0], [1], [0, 0, 1, 1], [], []>} : vector<432x8xf32>, vector<8x128xf32>, vector<432x128xf32> -> vector<432x128xf32>
    %c0_6 = arith.constant 0 : index
    %c0_7 = arith.constant 0 : index
    %5 = vector.load %arg5[%c0_6, %c0_7] : memref<1x128xf32, #tpu.memory_space<vmem>>, vector<1x128xf32>
    %6 = vector.broadcast %5 : vector<1x128xf32> to vector<432x128xf32>
    %7 = arith.addf %4, %6 : vector<432x128xf32>
    %8 = vector.shape_cast %7 : vector<432x128xf32> to vector<18x24x128xf32>
    %9 = vector.extract_strided_slice %8 {offsets = [0, 0, 0], sizes = [18, 16, 128], strides = [1, 1, 1]} : vector<18x24x128xf32> to vector<18x16x128xf32>
    %c0_8 = arith.constant 0 : index
    %c0_9 = arith.constant 0 : index
    %c0_10 = arith.constant 0 : index
    %10 = vector.load %arg9[%c0_8, %c0_9, %c0_10] : memref<18x16x128xf32, #tpu.memory_space<vmem>>, vector<18x16x128xf32>
    tpu.vector_store %arg9[%c0_8, %c0_9, %c0_10], %9 {strides = array<i32>} : memref<18x16x128xf32, #tpu.memory_space<vmem>>, vector<18x16x128xf32>,
    %11 = vector.extract_strided_slice %8 {offsets = [0, 1, 0], sizes = [18, 16, 128], strides = [1, 1, 1]} : vector<18x24x128xf32> to vector<18x16x128xf32>
    %c0_11 = arith.constant 0 : index
    %c0_12 = arith.constant 0 : index
    %c0_13 = arith.constant 0 : index
    %12 = vector.load %arg10[%c0_11, %c0_12, %c0_13] : memref<18x16x128xf32, #tpu.memory_space<vmem>>, vector<18x16x128xf32>
    tpu.vector_store %arg10[%c0_11, %c0_12, %c0_13], %11 {strides = array<i32>} : memref<18x16x128xf32, #tpu.memory_space<vmem>>, vector<18x16x128xf32>,
    %13 = vector.extract_strided_slice %8 {offsets = [0, 2, 0], sizes = [18, 16, 128], strides = [1, 1, 1]} : vector<18x24x128xf32> to vector<18x16x128xf32>
    %c0_14 = arith.constant 0 : index
    %c0_15 = arith.constant 0 : index
    %c0_16 = arith.constant 0 : index
    %14 = vector.load %arg11[%c0_14, %c0_15, %c0_16] : memref<18x16x128xf32, #tpu.memory_space<vmem>>, vector<18x16x128xf32>
    tpu.vector_store %arg11[%c0_14, %c0_15, %c0_16], %13 {strides = array<i32>} : memref<18x16x128xf32, #tpu.memory_space<vmem>>, vector<18x16x128xf32>,
    %cst_17 = arith.constant 0.000000e+00 : f32
    %15 = vector.broadcast %cst_17 : f32 to vector<18x1x128xf32>
    %c0_18 = arith.constant 0 : index
    %c0_19 = arith.constant 0 : index
    %c0_20 = arith.constant 0 : index
    %16 = vector.load %arg9[%c0_18, %c0_19, %c0_20] : memref<18x16x128xf32, #tpu.memory_space<vmem>>, vector<18x1x128xf32>
    tpu.vector_store %arg9[%c0_18, %c0_19, %c0_20], %15 {strides = array<i32>} : memref<18x16x128xf32, #tpu.memory_space<vmem>>, vector<18x1x128xf32>,
    %cst_21 = arith.constant 0.000000e+00 : f32
    %17 = vector.broadcast %cst_21 : f32 to vector<18x1x128xf32>
    %c0_22 = arith.constant 0 : index
    %c15 = arith.constant 15 : index
    %c0_23 = arith.constant 0 : index
    %18 = vector.load %arg11[%c0_22, %c15, %c0_23] : memref<18x16x128xf32, #tpu.memory_space<vmem>>, vector<18x1x128xf32>
    tpu.vector_store %arg11[%c0_22, %c15, %c0_23], %17 {strides = array<i32>} : memref<18x16x128xf32, #tpu.memory_space<vmem>>, vector<18x1x128xf32>,
    %c0_i32 = arith.constant 0 : i32
    %19 = arith.cmpi eq, %arg1, %c0_i32 : i32
    %20 = arith.extui %19 : i1 to i32
    %c0_i32_24 = arith.constant 0 : i32
    %21 = arith.cmpi ne, %20, %c0_i32_24 : i32
    scf.if %21 {
      %cst_62 = arith.constant 0.000000e+00 : f32
      %100 = vector.broadcast %cst_62 : f32 to vector<1x16x128xf32>
      %c0_63 = arith.constant 0 : index
      %c0_64 = arith.constant 0 : index
      %c0_65 = arith.constant 0 : index
      %101 = vector.load %arg9[%c0_63, %c0_64, %c0_65] : memref<18x16x128xf32, #tpu.memory_space<vmem>>, vector<1x16x128xf32>
      tpu.vector_store %arg9[%c0_63, %c0_64, %c0_65], %100 {strides = array<i32>} : memref<18x16x128xf32, #tpu.memory_space<vmem>>, vector<1x16x128xf32>,
      %cst_66 = arith.constant 0.000000e+00 : f32
      %102 = vector.broadcast %cst_66 : f32 to vector<1x16x128xf32>
      %c0_67 = arith.constant 0 : index
      %c0_68 = arith.constant 0 : index
      %c0_69 = arith.constant 0 : index
      %103 = vector.load %arg10[%c0_67, %c0_68, %c0_69] : memref<18x16x128xf32, #tpu.memory_space<vmem>>, vector<1x16x128xf32>
      tpu.vector_store %arg10[%c0_67, %c0_68, %c0_69], %102 {strides = array<i32>} : memref<18x16x128xf32, #tpu.memory_space<vmem>>, vector<1x16x128xf32>,
      %cst_70 = arith.constant 0.000000e+00 : f32
      %104 = vector.broadcast %cst_70 : f32 to vector<1x16x128xf32>
      %c0_71 = arith.constant 0 : index
      %c0_72 = arith.constant 0 : index
      %c0_73 = arith.constant 0 : index
      %105 = vector.load %arg11[%c0_71, %c0_72, %c0_73] : memref<18x16x128xf32, #tpu.memory_space<vmem>>, vector<1x16x128xf32>
      tpu.vector_store %arg11[%c0_71, %c0_72, %c0_73], %104 {strides = array<i32>} : memref<18x16x128xf32, #tpu.memory_space<vmem>>, vector<1x16x128xf32>,
    } else {
    }
    %c1_i32 = arith.constant 1 : i32
    %22 = arith.addi %arg1, %c1_i32 : i32
    %c16_i32 = arith.constant 16 : i32
    %23 = arith.muli %22, %c16_i32 : i32
    %c1_i32_25 = arith.constant 1 : i32
    %24 = arith.addi %23, %c1_i32_25 : i32
    %c16_i32_26 = arith.constant 16 : i32
    %25 = arith.cmpi sgt, %24, %c16_i32_26 : i32
    %26 = arith.extui %25 : i1 to i32
    %c0_i32_27 = arith.constant 0 : i32
    %27 = arith.cmpi ne, %26, %c0_i32_27 : i32
    scf.if %27 {
      %100 = tpu.iota {dimensions = array<i32: 0>} : vector<1x1x1xi32>
      %c17_i32 = arith.constant 17 : i32
      %101 = vector.broadcast %c17_i32 : i32 to vector<1x1x1xi32>
      %102 = arith.addi %100, %101 : vector<1x1x1xi32>
      %c16_i32_62 = arith.constant 16 : i32
      %103 = arith.muli %arg1, %c16_i32_62 : i32
      %104 = vector.broadcast %103 : i32 to vector<1x1x1xi32>
      %105 = arith.addi %102, %104 : vector<1x1x1xi32>
      %c1_i32_63 = arith.constant 1 : i32
      %106 = vector.broadcast %c1_i32_63 : i32 to vector<1x1x1xi32>
      %107 = arith.subi %105, %106 : vector<1x1x1xi32>
      %c16_i32_64 = arith.constant 16 : i32
      %108 = vector.broadcast %c16_i32_64 : i32 to vector<1x1x1xi32>
      %109 = arith.cmpi slt, %107, %108 : vector<1x1x1xi32>
      %c17 = arith.constant 17 : index
      %c0_65 = arith.constant 0 : index
      %c0_66 = arith.constant 0 : index
      %110 = vector.load %arg9[%c17, %c0_65, %c0_66] : memref<18x16x128xf32, #tpu.memory_space<vmem>>, vector<1x16x128xf32>
      %cst_67 = arith.constant 0.000000e+00 : f32
      %111 = vector.broadcast %cst_67 : f32 to vector<1x16x128xf32>
      %112 = vector.shape_cast %109 : vector<1x1x1xi1> to vector<1x1x1xi1>
      %113 = vector.broadcast %112 : vector<1x1x1xi1> to vector<1x16x128xi1>
      %114 = arith.select %113, %110, %111 : vector<1x16x128xi1>, vector<1x16x128xf32>
      %c17_68 = arith.constant 17 : index
      %c0_69 = arith.constant 0 : index
      %c0_70 = arith.constant 0 : index
      %115 = vector.load %arg9[%c17_68, %c0_69, %c0_70] : memref<18x16x128xf32, #tpu.memory_space<vmem>>, vector<1x16x128xf32>
      tpu.vector_store %arg9[%c17_68, %c0_69, %c0_70], %114 {strides = array<i32>} : memref<18x16x128xf32, #tpu.memory_space<vmem>>, vector<1x16x128xf32>,
      %c17_71 = arith.constant 17 : index
      %c0_72 = arith.constant 0 : index
      %c0_73 = arith.constant 0 : index
      %116 = vector.load %arg10[%c17_71, %c0_72, %c0_73] : memref<18x16x128xf32, #tpu.memory_space<vmem>>, vector<1x16x128xf32>
      %cst_74 = arith.constant 0.000000e+00 : f32
      %117 = vector.broadcast %cst_74 : f32 to vector<1x16x128xf32>
      %118 = vector.shape_cast %109 : vector<1x1x1xi1> to vector<1x1x1xi1>
      %119 = vector.broadcast %118 : vector<1x1x1xi1> to vector<1x16x128xi1>
      %120 = arith.select %119, %116, %117 : vector<1x16x128xi1>, vector<1x16x128xf32>
      %c17_75 = arith.constant 17 : index
      %c0_76 = arith.constant 0 : index
      %c0_77 = arith.constant 0 : index
      %121 = vector.load %arg10[%c17_75, %c0_76, %c0_77] : memref<18x16x128xf32, #tpu.memory_space<vmem>>, vector<1x16x128xf32>
      tpu.vector_store %arg10[%c17_75, %c0_76, %c0_77], %120 {strides = array<i32>} : memref<18x16x128xf32, #tpu.memory_space<vmem>>, vector<1x16x128xf32>,
      %c17_78 = arith.constant 17 : index
      %c0_79 = arith.constant 0 : index
      %c0_80 = arith.constant 0 : index
      %122 = vector.load %arg11[%c17_78, %c0_79, %c0_80] : memref<18x16x128xf32, #tpu.memory_space<vmem>>, vector<1x16x128xf32>
      %cst_81 = arith.constant 0.000000e+00 : f32
      %123 = vector.broadcast %cst_81 : f32 to vector<1x16x128xf32>
      %124 = vector.shape_cast %109 : vector<1x1x1xi1> to vector<1x1x1xi1>
      %125 = vector.broadcast %124 : vector<1x1x1xi1> to vector<1x16x128xi1>
      %126 = arith.select %125, %122, %123 : vector<1x16x128xi1>, vector<1x16x128xf32>
      %c17_82 = arith.constant 17 : index
      %c0_83 = arith.constant 0 : index
      %c0_84 = arith.constant 0 : index
      %127 = vector.load %arg11[%c17_82, %c0_83, %c0_84] : memref<18x16x128xf32, #tpu.memory_space<vmem>>, vector<1x16x128xf32>
      tpu.vector_store %arg11[%c17_82, %c0_83, %c0_84], %126 {strides = array<i32>} : memref<18x16x128xf32, #tpu.memory_space<vmem>>, vector<1x16x128xf32>,
    } else {
    }
    %c0_28 = arith.constant 0 : index
    %c0_29 = arith.constant 0 : index
    %28 = vector.load %arg6[%c0_28, %c0_29] : memref<9x128xf32, #tpu.memory_space<vmem>>, vector<9x128xf32>
    %c0_30 = arith.constant 0 : index
    %c0_31 = arith.constant 0 : index
    %29 = vector.load %arg7[%c0_30, %c0_31] : memref<1x128xf32, #tpu.memory_space<vmem>>, vector<1x128xf32>
    %c0_32 = arith.constant 0 : index
    %c0_33 = arith.constant 0 : index
    %c0_34 = arith.constant 0 : index
    %30 = vector.load %arg9[%c0_32, %c0_33, %c0_34] : memref<18x16x128xf32, #tpu.memory_space<vmem>>, vector<16x16x128xf32>
    %31 = vector.extract_strided_slice %28 {offsets = [0, 0], sizes = [1, 128], strides = [1, 1]} : vector<9x128xf32> to vector<1x128xf32>
    %32 = vector.shape_cast %31 : vector<1x128xf32> to vector<128xf32>
    %33 = vector.shape_cast %32 : vector<128xf32> to vector<1x1x128xf32>
    %34 = vector.broadcast %33 : vector<1x1x128xf32> to vector<16x16x128xf32>
    %35 = arith.mulf %30, %34 : vector<16x16x128xf32>
    %c0_35 = arith.constant 0 : index
    %c0_36 = arith.constant 0 : index
    %c0_37 = arith.constant 0 : index
    %36 = vector.load %arg10[%c0_35, %c0_36, %c0_37] : memref<18x16x128xf32, #tpu.memory_space<vmem>>, vector<16x16x128xf32>
    %37 = vector.extract_strided_slice %28 {offsets = [1, 0], sizes = [1, 128], strides = [1, 1]} : vector<9x128xf32> to vector<1x128xf32>
    %38 = vector.shape_cast %37 : vector<1x128xf32> to vector<128xf32>
    %39 = vector.shape_cast %38 : vector<128xf32> to vector<1x1x128xf32>
    %40 = vector.broadcast %39 : vector<1x1x128xf32> to vector<16x16x128xf32>
    %41 = arith.mulf %36, %40 : vector<16x16x128xf32>
    %42 = arith.addf %35, %41 : vector<16x16x128xf32>
    %c0_38 = arith.constant 0 : index
    %c0_39 = arith.constant 0 : index
    %c0_40 = arith.constant 0 : index
    %43 = vector.load %arg11[%c0_38, %c0_39, %c0_40] : memref<18x16x128xf32, #tpu.memory_space<vmem>>, vector<16x16x128xf32>
    %44 = vector.extract_strided_slice %28 {offsets = [2, 0], sizes = [1, 128], strides = [1, 1]} : vector<9x128xf32> to vector<1x128xf32>
    %45 = vector.shape_cast %44 : vector<1x128xf32> to vector<128xf32>
    %46 = vector.shape_cast %45 : vector<128xf32> to vector<1x1x128xf32>
    %47 = vector.broadcast %46 : vector<1x1x128xf32> to vector<16x16x128xf32>
    %48 = arith.mulf %43, %47 : vector<16x16x128xf32>
    %49 = arith.addf %42, %48 : vector<16x16x128xf32>
    %c1 = arith.constant 1 : index
    %c0_41 = arith.constant 0 : index
    %c0_42 = arith.constant 0 : index
    %50 = vector.load %arg9[%c1, %c0_41, %c0_42] : memref<18x16x128xf32, #tpu.memory_space<vmem>>, vector<16x16x128xf32>
    %51 = vector.extract_strided_slice %28 {offsets = [3, 0], sizes = [1, 128], strides = [1, 1]} : vector<9x128xf32> to vector<1x128xf32>
    %52 = vector.shape_cast %51 : vector<1x128xf32> to vector<128xf32>
    %53 = vector.shape_cast %52 : vector<128xf32> to vector<1x1x128xf32>
    %54 = vector.broadcast %53 : vector<1x1x128xf32> to vector<16x16x128xf32>
    %55 = arith.mulf %50, %54 : vector<16x16x128xf32>
    %56 = arith.addf %49, %55 : vector<16x16x128xf32>
    %c1_43 = arith.constant 1 : index
    %c0_44 = arith.constant 0 : index
    %c0_45 = arith.constant 0 : index
    %57 = vector.load %arg10[%c1_43, %c0_44, %c0_45] : memref<18x16x128xf32, #tpu.memory_space<vmem>>, vector<16x16x128xf32>
    %58 = vector.extract_strided_slice %28 {offsets = [4, 0], sizes = [1, 128], strides = [1, 1]} : vector<9x128xf32> to vector<1x128xf32>
    %59 = vector.shape_cast %58 : vector<1x128xf32> to vector<128xf32>
    %60 = vector.shape_cast %59 : vector<128xf32> to vector<1x1x128xf32>
    %61 = vector.broadcast %60 : vector<1x1x128xf32> to vector<16x16x128xf32>
    %62 = arith.mulf %57, %61 : vector<16x16x128xf32>
    %63 = arith.addf %56, %62 : vector<16x16x128xf32>
    %c1_46 = arith.constant 1 : index
    %c0_47 = arith.constant 0 : index
    %c0_48 = arith.constant 0 : index
    %64 = vector.load %arg11[%c1_46, %c0_47, %c0_48] : memref<18x16x128xf32, #tpu.memory_space<vmem>>, vector<16x16x128xf32>
    %65 = vector.extract_strided_slice %28 {offsets = [5, 0], sizes = [1, 128], strides = [1, 1]} : vector<9x128xf32> to vector<1x128xf32>
    %66 = vector.shape_cast %65 : vector<1x128xf32> to vector<128xf32>
    %67 = vector.shape_cast %66 : vector<128xf32> to vector<1x1x128xf32>
    %68 = vector.broadcast %67 : vector<1x1x128xf32> to vector<16x16x128xf32>
    %69 = arith.mulf %64, %68 : vector<16x16x128xf32>
    %70 = arith.addf %63, %69 : vector<16x16x128xf32>
    %c2 = arith.constant 2 : index
    %c0_49 = arith.constant 0 : index
    %c0_50 = arith.constant 0 : index
    %71 = vector.load %arg9[%c2, %c0_49, %c0_50] : memref<18x16x128xf32, #tpu.memory_space<vmem>>, vector<16x16x128xf32>
    %72 = vector.extract_strided_slice %28 {offsets = [6, 0], sizes = [1, 128], strides = [1, 1]} : vector<9x128xf32> to vector<1x128xf32>
    %73 = vector.shape_cast %72 : vector<1x128xf32> to vector<128xf32>
    %74 = vector.shape_cast %73 : vector<128xf32> to vector<1x1x128xf32>
    %75 = vector.broadcast %74 : vector<1x1x128xf32> to vector<16x16x128xf32>
    %76 = arith.mulf %71, %75 : vector<16x16x128xf32>
    %77 = arith.addf %70, %76 : vector<16x16x128xf32>
    %c2_51 = arith.constant 2 : index
    %c0_52 = arith.constant 0 : index
    %c0_53 = arith.constant 0 : index
    %78 = vector.load %arg10[%c2_51, %c0_52, %c0_53] : memref<18x16x128xf32, #tpu.memory_space<vmem>>, vector<16x16x128xf32>
    %79 = vector.extract_strided_slice %28 {offsets = [7, 0], sizes = [1, 128], strides = [1, 1]} : vector<9x128xf32> to vector<1x128xf32>
    %80 = vector.shape_cast %79 : vector<1x128xf32> to vector<128xf32>
    %81 = vector.shape_cast %80 : vector<128xf32> to vector<1x1x128xf32>
    %82 = vector.broadcast %81 : vector<1x1x128xf32> to vector<16x16x128xf32>
    %83 = arith.mulf %78, %82 : vector<16x16x128xf32>
    %84 = arith.addf %77, %83 : vector<16x16x128xf32>
    %c2_54 = arith.constant 2 : index
    %c0_55 = arith.constant 0 : index
    %c0_56 = arith.constant 0 : index
    %85 = vector.load %arg11[%c2_54, %c0_55, %c0_56] : memref<18x16x128xf32, #tpu.memory_space<vmem>>, vector<16x16x128xf32>
    %86 = vector.extract_strided_slice %28 {offsets = [8, 0], sizes = [1, 128], strides = [1, 1]} : vector<9x128xf32> to vector<1x128xf32>
    %87 = vector.shape_cast %86 : vector<1x128xf32> to vector<128xf32>
    %88 = vector.shape_cast %87 : vector<128xf32> to vector<1x1x128xf32>
    %89 = vector.broadcast %88 : vector<1x1x128xf32> to vector<16x16x128xf32>
    %90 = arith.mulf %85, %89 : vector<16x16x128xf32>
    %91 = arith.addf %84, %90 : vector<16x16x128xf32>
    %92 = vector.shape_cast %29 : vector<1x128xf32> to vector<1x1x128xf32>
    %93 = vector.broadcast %92 : vector<1x1x128xf32> to vector<16x16x128xf32>
    %94 = arith.addf %91, %93 : vector<16x16x128xf32>
    %cst_57 = arith.constant 0.000000e+00 : f32
    %95 = vector.broadcast %cst_57 : f32 to vector<16x16x128xf32>
    %96 = arith.maximumf %94, %95 : vector<16x16x128xf32>
    %c0_58 = arith.constant 0 : index
    %c0_59 = arith.constant 0 : index
    %c0_60 = arith.constant 0 : index
    %c0_61 = arith.constant 0 : index
    %97 = vector.load %arg8[%c0_58, %c0_59, %c0_60, %c0_61] : memref<1x16x16x128xf32, #tpu.memory_space<vmem>>, vector<1x16x16x128xf32>
    %98 = vector.shape_cast %97 : vector<1x16x16x128xf32> to vector<16x16x128xf32>
    %99 = vector.shape_cast %96 : vector<16x16x128xf32> to vector<1x16x16x128xf32>
    tpu.vector_store %arg8[%c0_58, %c0_59, %c0_60, %c0_61], %99 {strides = array<i32>} : memref<1x16x16x128xf32, #tpu.memory_space<vmem>>, vector<1x16x16x128xf32>,
    return
  }
  func.func @transform_0(%arg0: i32, %arg1: i32, %arg2: i32) -> (i32, i32, i32, i32, i32) {
    %c0_i32 = arith.constant 0 : i32
    %c0_i32_0 = arith.constant 0 : i32
    %c0_i32_1 = arith.constant 0 : i32
    %c0_i32_2 = arith.constant 0 : i32
    return %arg0, %arg1, %c0_i32, %c0_i32_0, %c0_i32_1 : i32, i32, i32, i32, i32
  }
  func.func @transform_1(%arg0: i32, %arg1: i32, %arg2: i32) -> (i32, i32) {
    %c0_i32 = arith.constant 0 : i32
    %c0_i32_0 = arith.constant 0 : i32
    return %c0_i32, %arg2 : i32, i32
  }
  func.func @transform_2(%arg0: i32, %arg1: i32, %arg2: i32) -> (i32, i32) {
    %c0_i32 = arith.constant 0 : i32
    %c0_i32_0 = arith.constant 0 : i32
    return %c0_i32, %arg2 : i32, i32
  }
  func.func @transform_3(%arg0: i32, %arg1: i32, %arg2: i32) -> (i32, i32) {
    %c0_i32 = arith.constant 0 : i32
    %c0_i32_0 = arith.constant 0 : i32
    return %c0_i32, %arg2 : i32, i32
  }
  func.func @transform_4(%arg0: i32, %arg1: i32, %arg2: i32) -> (i32, i32) {
    %c0_i32 = arith.constant 0 : i32
    %c0_i32_0 = arith.constant 0 : i32
    return %c0_i32, %arg2 : i32, i32
  }
  func.func @transform_5(%arg0: i32, %arg1: i32, %arg2: i32) -> (i32, i32, i32, i32) {
    %c0_i32 = arith.constant 0 : i32
    %c0_i32_0 = arith.constant 0 : i32
    return %arg0, %arg1, %c0_i32, %arg2 : i32, i32, i32, i32
  }
}

</mosaic_0001>

<llo_original>
// kernel: light_conv_bn_act.1
$region0: #{light_conv_bn_act.1}
  #allocation0 [shape = 'u32[]', space=smem, size = 0x4, offset = 0x4, fixed_abs, tag = 'smem constant byte address 0x4 - core index']
  #allocation1 [shape = 'u32[144,128]{1,0:T(1,128)}', space=vmem, size = 0x12000, scoped, tag = 'internal scratch']
  #allocation2 [shape = 'f32[18,16,128]{2,1,0:T(8,128)}', space=vmem, size = 0x24000, scoped, tag = 'scratch operand']
  #allocation3 [shape = 'f32[18,16,128]{2,1,0:T(8,128)}', space=vmem, size = 0x24000, scoped, tag = 'scratch operand']
  #allocation4 [shape = 'f32[18,16,128]{2,1,0:T(8,128)}', space=vmem, size = 0x24000, scoped, tag = 'scratch operand']
  %s0 = inlined_call_operand.vmem [shape: f32[2,1,18,24,8], index: 0, kind: input, shape index: {}]
  %s1 = inlined_call_operand.vmem [shape: f32[8,128], index: 1, kind: input, shape index: {}]
  %s2 = inlined_call_operand.vmem [shape: f32[1,128], index: 2, kind: input, shape index: {}]
  %s3 = inlined_call_operand.vmem [shape: f32[9,128], index: 3, kind: input, shape index: {}]
  %s4 = inlined_call_operand.vmem [shape: f32[1,128], index: 4, kind: input, shape index: {}]
  %s5 = inlined_call_operand.vmem [shape: f32[2,16,16,128], index: 5, kind: output, shape index: {}]
  %s6 = sld [smem:[#allocation0]]
  $region61: #{light_conv_bn_act.1} parent=0
    _
  %s8 = ssub.s32 1, %s6
  %s9 = scalar_select 0, %s8, %s6
  loop: start=0, step=1, limit=4
  $region2: #{light_conv_bn_act.1} parent=0 // loop_pre_header
    _
  $region3: #{light_conv_bn_act.1} parent=0 // loop_header
    %s11 = sphi 0, %s15
    %p12 = scmp.ge.s32.totalorder %s11, 4
    %s18 = sphi 0, %s37
    %s19 = sphi 0, %s33
    %s20 = sphi 0, %s29
    %s21 = sphi 0, %s18
    %s22 = sphi 0, %s19
    %s23 = sphi 0, %s20
    %s24 = sphi 0, %s21
    %s25 = sphi 0, %s22
    %s26 = sphi 0, %s23
    %s42 = sphi 0, %s44
    %s45 = sphi 0, %s42
    %s46 = sphi 0, %s45
    %s62 = sphi 0, %s46
    %s68 = sphi 0, %s70
    %s71 = sphi 0, %s68
    %s72 = sphi 0, %s71
    %s88 = sphi 0, %s72
    %s94 = sphi 0, %s96
    %s97 = sphi 0, %s94
    %s98 = sphi 0, %s97
    %s114 = sphi 0, %s98
    %s120 = sphi 0, %s122
    %s123 = sphi 0, %s120
    %s124 = sphi 0, %s123
    %s140 = sphi 0, %s124
    %s146 = sphi 0, %s148
    %s149 = sphi 0, %s146
    %s150 = sphi 0, %s149
    %s166 = sphi 0, %s150
    %s176 = sphi 0, %s178
    %s179 = sphi 0, %s176
    %s180 = sphi 0, %s179
    %s196 = sphi 0, %s180
  $region4: #{light_conv_bn_act.1} parent=0 // loop_header_branch
    %14 = sbr.rel (%p12) target = $region8
  $region5: #{light_conv_bn_act.1} parent=0 // loop_body
    %s16 = ssub.s32 %s11, 1
    %s17 = ssub.s32 %s11, 2
    %s27 = sadd.s32 1, %s20
    %p28 = scmp.ge.s32.totalorder %s27, 1
    %s29 = scalar_select %p28, 0, %s27
    %s30 = sadd.s32 1, %s19
    %s31 = scalar_select %p28, %s30, %s19
    %p32 = scmp.ge.s32.totalorder %s31, 1
    %s33 = scalar_select %p32, 0, %s31
    %s34 = sadd.s32 1, %s18
    %s35 = scalar_select %p32, %s34, %s18
    %p36 = scmp.ge.s32.totalorder %s35, 2
    %s37 = scalar_select %p36, 0, %s35
    %s38 = ssub.s32 %s18, %s37
    %s39 = ssub.s32 %s19, %s33
    %s40 = sor.u32 %s38, %s39
    %p41 = scmp.eq.s32.totalorder %s40, 0
    %s43 = sadd.s32 %s42, 1
    %s44 = scalar_select %p41, %s42, %s43
    %p47 = pneg %p41
    %p48 = scmp.eq.s32.totalorder %s11, 1
    %p49 = por %p47, %p48
    %p50 = scmp.ne.s32.totalorder %s42, %s45
    %p51 = scmp.eq.s32.totalorder %s11, 0
    %p52 = por %p50, %p51
    %p53 = scmp.ne.s32.totalorder %s42, %s45
    %p54 = scmp.eq.s32.totalorder %s16, 1
    %p55 = por %p53, %p54
    %p56 = scmp.ne.s32.totalorder %s45, %s46
    %p57 = scmp.eq.s32.totalorder %s16, 0
    %p58 = por %p56, %p57
    %p59 = scmp.ne.s32.totalorder %s45, %s46
    %p60 = scmp.eq.s32.totalorder %s17, 1
    %p61 = por %p59, %p60
    %p63 = scmp.ne.s32.totalorder %s46, %s62
    %p64 = scmp.eq.s32.totalorder %s17, 0
    %p65 = por %p63, %p64
    %s66 = ssub.s32 %s20, %s29
    %p67 = scmp.eq.s32.totalorder %s66, 0
    %s69 = sadd.s32 %s68, 1
    %s70 = scalar_select %p67, %s68, %s69
    %p73 = pneg %p67
    %p74 = scmp.eq.s32.totalorder %s11, 1
    %p75 = por %p73, %p74
    %p76 = scmp.ne.s32.totalorder %s68, %s71
    %p77 = scmp.eq.s32.totalorder %s11, 0
    %p78 = por %p76, %p77
    %p79 = scmp.ne.s32.totalorder %s68, %s71
    %p80 = scmp.eq.s32.totalorder %s16, 1
    %p81 = por %p79, %p80
    %p82 = scmp.ne.s32.totalorder %s71, %s72
    %p83 = scmp.eq.s32.totalorder %s16, 0
    %p84 = por %p82, %p83
    %p85 = scmp.ne.s32.totalorder %s71, %s72
    %p86 = scmp.eq.s32.totalorder %s17, 1
    %p87 = por %p85, %p86
    %p89 = scmp.ne.s32.totalorder %s72, %s88
    %p90 = scmp.eq.s32.totalorder %s17, 0
    %p91 = por %p89, %p90
    %s92 = ssub.s32 %s20, %s29
    %p93 = scmp.eq.s32.totalorder %s92, 0
    %s95 = sadd.s32 %s94, 1
    %s96 = scalar_select %p93, %s94, %s95
    %p99 = pneg %p93
    %p100 = scmp.eq.s32.totalorder %s11, 1
    %p101 = por %p99, %p100
    %p102 = scmp.ne.s32.totalorder %s94, %s97
    %p103 = scmp.eq.s32.totalorder %s11, 0
    %p104 = por %p102, %p103
    %p105 = scmp.ne.s32.totalorder %s94, %s97
    %p106 = scmp.eq.s32.totalorder %s16, 1
    %p107 = por %p105, %p106
    %p108 = scmp.ne.s32.totalorder %s97, %s98
    %p109 = scmp.eq.s32.totalorder %s16, 0
    %p110 = por %p108, %p109
    %p111 = scmp.ne.s32.totalorder %s97, %s98
    %p112 = scmp.eq.s32.totalorder %s17, 1
    %p113 = por %p111, %p112
    %p115 = scmp.ne.s32.totalorder %s98, %s114
    %p116 = scmp.eq.s32.totalorder %s17, 0
    %p117 = por %p115, %p116
    %s118 = ssub.s32 %s20, %s29
    %p119 = scmp.eq.s32.totalorder %s118, 0
    %s121 = sadd.s32 %s120, 1
    %s122 = scalar_select %p119, %s120, %s121
    %p125 = pneg %p119
    %p126 = scmp.eq.s32.totalorder %s11, 1
    %p127 = por %p125, %p126
    %p128 = scmp.ne.s32.totalorder %s120, %s123
    %p129 = scmp.eq.s32.totalorder %s11, 0
    %p130 = por %p128, %p129
    %p131 = scmp.ne.s32.totalorder %s120, %s123
    %p132 = scmp.eq.s32.totalorder %s16, 1
    %p133 = por %p131, %p132
    %p134 = scmp.ne.s32.totalorder %s123, %s124
    %p135 = scmp.eq.s32.totalorder %s16, 0
    %p136 = por %p134, %p135
    %p137 = scmp.ne.s32.totalorder %s123, %s124
    %p138 = scmp.eq.s32.totalorder %s17, 1
    %p139 = por %p137, %p138
    %p141 = scmp.ne.s32.totalorder %s124, %s140
    %p142 = scmp.eq.s32.totalorder %s17, 0
    %p143 = por %p141, %p142
    %s144 = ssub.s32 %s20, %s29
    %p145 = scmp.eq.s32.totalorder %s144, 0
    %s147 = sadd.s32 %s146, 1
    %s148 = scalar_select %p145, %s146, %s147
    %p151 = pneg %p145
    %p152 = scmp.eq.s32.totalorder %s11, 1
    %p153 = por %p151, %p152
    %p154 = scmp.ne.s32.totalorder %s146, %s149
    %p155 = scmp.eq.s32.totalorder %s11, 0
    %p156 = por %p154, %p155
    %p157 = scmp.ne.s32.totalorder %s146, %s149
    %p158 = scmp.eq.s32.totalorder %s16, 1
    %p159 = por %p157, %p158
    %p160 = scmp.ne.s32.totalorder %s149, %s150
    %p161 = scmp.eq.s32.totalorder %s16, 0
    %p162 = por %p160, %p161
    %p163 = scmp.ne.s32.totalorder %s149, %s150
    %p164 = scmp.eq.s32.totalorder %s17, 1
    %p165 = por %p163, %p164
    %p167 = scmp.ne.s32.totalorder %s150, %s166
    %p168 = scmp.eq.s32.totalorder %s17, 0
    %p169 = por %p167, %p168
    %s170 = ssub.s32 %s18, %s37
    %s171 = ssub.s32 %s19, %s33
    %s172 = sor.u32 %s170, %s171
    %s173 = ssub.s32 %s20, %s29
    %s174 = sor.u32 %s172, %s173
    %p175 = scmp.eq.s32.totalorder %s174, 0
    %s177 = sadd.s32 %s176, 1
    %s178 = scalar_select %p175, %s176, %s177
    %p181 = pneg %p175
    %p182 = scmp.eq.s32.totalorder %s11, 1
    %p183 = por %p181, %p182
    %p184 = scmp.ne.s32.totalorder %s176, %s179
    %p185 = scmp.eq.s32.totalorder %s11, 0
    %p186 = por %p184, %p185
    %p187 = scmp.ne.s32.totalorder %s176, %s179
    %p188 = scmp.eq.s32.totalorder %s16, 1
    %p189 = por %p187, %p188
    %p190 = scmp.ne.s32.totalorder %s179, %s180
    %p191 = scmp.eq.s32.totalorder %s16, 0
    %p192 = por %p190, %p191
    %p193 = scmp.ne.s32.totalorder %s179, %s180
    %p194 = scmp.eq.s32.totalorder %s17, 1
    %p195 = por %p193, %p194
    %p197 = scmp.ne.s32.totalorder %s180, %s196
    %p198 = scmp.eq.s32.totalorder %s17, 0
    %p199 = por %p197, %p198
    %p200 = scmp.le.s32.totalorder 1, %s11
    %p201 = scmp.lt.s32.totalorder %s11, 3
    %p202 = pnand %p200, %p201
    %p203 = pneg %p202
    // Predicated region
    $region9: #{light_conv_bn_act.1} parent=5 // pred_check
      _
    $region10: #{light_conv_bn_act.1} parent=5 // pred_check_branch
      %205 = sbr.rel (%p202) target = $region12
    $region11: #{light_conv_bn_act.1} parent=5 // pred_region
      %s206 = ssub.s32 %s11, 1
      // Predicated region
      $region13: #{light_conv_bn_act.1} parent=11 // pred_check
        %p207 = pneg %p84
      $region14: #{light_conv_bn_act.1} parent=11 // pred_check_branch
        %209 = sbr.rel (%p207) target = $region16
      $region15: #{light_conv_bn_act.1} parent=11 // pred_region
        %p210 = scmp.lt.s32.totalorder %s23, 0
        %s211 = scalar_select %p210, %s23, 0
        %s212 = smul.addr %s211, 8
        %s213 = scalar_lea.vmem %s1, %s212
      $region16: #{light_conv_bn_act.1} parent=11 // pred_fallthru
        _
      // Predicated region
      $region17: #{light_conv_bn_act.1} parent=11 // pred_check
        %p214 = pneg %p110
      $region18: #{light_conv_bn_act.1} parent=11 // pred_check_branch
        %216 = sbr.rel (%p214) target = $region20
      $region19: #{light_conv_bn_act.1} parent=11 // pred_region
        %p217 = scmp.lt.s32.totalorder %s23, 0
        %s218 = scalar_select %p217, %s23, 0
        %s219 = scalar_lea.vmem %s2, %s218
      $region20: #{light_conv_bn_act.1} parent=11 // pred_fallthru
        _
      // Predicated region
      $region21: #{light_conv_bn_act.1} parent=11 // pred_check
        %p220 = pneg %p136
      $region22: #{light_conv_bn_act.1} parent=11 // pred_check_branch
        %222 = sbr.rel (%p220) target = $region24
      $region23: #{light_conv_bn_act.1} parent=11 // pred_region
        %p223 = scmp.lt.s32.totalorder %s23, 0
        %s224 = scalar_select %p223, %s23, 0
        %s225 = smul.addr %s224, 8
        %s226 = scalar_lea.vmem %s3, %s225
      $region24: #{light_conv_bn_act.1} parent=11 // pred_fallthru
        _
      // Predicated region
      $region25: #{light_conv_bn_act.1} parent=11 // pred_check
        %p227 = pneg %p162
      $region26: #{light_conv_bn_act.1} parent=11 // pred_check_branch
        %229 = sbr.rel (%p227) target = $region28
      $region27: #{light_conv_bn_act.1} parent=11 // pred_region
        %p230 = scmp.lt.s32.totalorder %s23, 0
        %s231 = scalar_select %p230, %s23, 0
        %s232 = scalar_lea.vmem %s4, %s231
      $region28: #{light_conv_bn_act.1} parent=11 // pred_fallthru
        _
    $region12: #{light_conv_bn_act.1} parent=5 // pred_fallthru
      _
    %p233 = scmp.lt.s32.totalorder %s11, 2
    // Predicated region
    $region29: #{light_conv_bn_act.1} parent=5 // pred_check
      %p234 = pneg %p233
    $region30: #{light_conv_bn_act.1} parent=5 // pred_check_branch
      %236 = sbr.rel (%p234) target = $region32
    $region31: #{light_conv_bn_act.1} parent=5 // pred_region
      // Predicated region
      $region33: #{light_conv_bn_act.1} parent=31 // pred_check
        %p237 = pneg %p52
      $region34: #{light_conv_bn_act.1} parent=31 // pred_check_branch
        %239 = sbr.rel (%p237) target = $region36
      $region35: #{light_conv_bn_act.1} parent=31 // pred_region
        %p240 = scmp.lt.s32.totalorder %s18, 1
        %s241 = scalar_select %p240, %s18, 1
        %p242 = scmp.lt.s32.totalorder %s19, 0
        %s243 = scalar_select %p242, %s19, 0
        %s244 = smul.addr %s243, 54
        %s245 = smul.addr %s241, 54
        %s246 = sadd.s32 %s244, %s245
        %s247 = smul.addr %s246, 8
        %s248 = scalar_lea.vmem %s0, %s247
      $region36: #{light_conv_bn_act.1} parent=31 // pred_fallthru
        _
    $region32: #{light_conv_bn_act.1} parent=5 // pred_fallthru
      _
    %p249 = scmp.le.s32.totalorder 1, %s11
    %p250 = scmp.lt.s32.totalorder %s11, 3
    %p251 = pnand %p249, %p250
    %p252 = pneg %p251
    // Predicated region
    $region37: #{light_conv_bn_act.1} parent=5 // pred_check
      _
    $region38: #{light_conv_bn_act.1} parent=5 // pred_check_branch
      %254 = sbr.rel (%p251) target = $region40
    $region39: #{light_conv_bn_act.1} parent=5 // pred_region
      %s255 = ssub.s32 %s11, 1
      %p256 = scmp.lt.s32.totalorder %s21, 1
      %s257 = scalar_select %p256, %s21, 1
      %p258 = scmp.lt.s32.totalorder %s22, 0
      %s259 = scalar_select %p258, %s22, 0
      %s260 = smul.addr %s259, 54
      %s261 = smul.addr %s257, 54
      %s262 = sadd.s32 %s260, %s261
      %s263 = smul.addr %s262, 8
      %s264 = scalar_lea.vmem %s0, %s263
      %p265 = pneg %p58
      %p266 = pneg %p55
      %p267 = scmp.lt.s32.totalorder %s23, 0
      %s268 = scalar_select %p267, %s23, 0
      %s269 = smul.addr %s268, 8
      %s270 = scalar_lea.vmem %s1, %s269
      %p271 = pneg %p84
      %p272 = pneg %p81
      %p273 = scmp.lt.s32.totalorder %s23, 0
      %s274 = scalar_select %p273, %s23, 0
      %s275 = scalar_lea.vmem %s2, %s274
      %p276 = pneg %p110
      %p277 = pneg %p107
      %p278 = scmp.lt.s32.totalorder %s23, 0
      %s279 = scalar_select %p278, %s23, 0
      %s280 = smul.addr %s279, 8
      %s281 = scalar_lea.vmem %s3, %s280
      %p282 = pneg %p136
      %p283 = pneg %p133
      %p284 = scmp.lt.s32.totalorder %s23, 0
      %s285 = scalar_select %p284, %s23, 0
      %s286 = scalar_lea.vmem %s4, %s285
      %p287 = pneg %p162
      %p288 = pneg %p159
      %p289 = pneg %p192
      %p290 = pneg %p189
      %s291 = smul.u32 16, %s22
      %p292 = scmp.lt.s32.totalorder %s21, 1
      %s293 = scalar_select %p292, %s21, 1
      %p294 = scmp.lt.s32.totalorder %s291, 15
      %s295 = scalar_select %p294, %s291, 15
      %p296 = scmp.lt.s32.totalorder %s23, 0
      %s297 = scalar_select %p296, %s23, 0
      %s298 = smul.addr %s295, 2
      %s299 = sadd.s32 %s297, %s298
      %s300 = smul.addr %s293, 32
      %s301 = sadd.s32 %s299, %s300
      %s302 = smul.addr %s301, 8
      %s303 = scalar_lea.vmem %s5, %s302
      %p304 = scmp.lt.s32.totalorder %s21, 1
      %s305 = scalar_select %p304, %s21, 1
      %p306 = scmp.lt.s32.totalorder %s22, 0
      %s307 = scalar_select %p306, %s22, 0
      %s308 = smul.addr %s307, 54
      %s309 = smul.addr %s305, 54
      %s310 = sadd.s32 %s308, %s309
      %s311 = smul.addr %s310, 8
      %s312 = scalar_lea.vmem %s0, %s311
      %p313 = scmp.lt.s32.totalorder %s23, 0
      %s314 = scalar_select %p313, %s23, 0
      %s315 = smul.addr %s314, 8
      %s316 = scalar_lea.vmem %s1, %s315
      %p317 = scmp.lt.s32.totalorder %s23, 0
      %s318 = scalar_select %p317, %s23, 0
      %s319 = scalar_lea.vmem %s2, %s318
      %p320 = scmp.lt.s32.totalorder %s23, 0
      %s321 = scalar_select %p320, %s23, 0
      %s322 = smul.addr %s321, 8
      %s323 = scalar_lea.vmem %s3, %s322
      %p324 = scmp.lt.s32.totalorder %s23, 0
      %s325 = scalar_select %p324, %s23, 0
      %s326 = scalar_lea.vmem %s4, %s325
      %s327 = smul.u32 16, %s22
      %p328 = scmp.lt.s32.totalorder %s21, 1
      %s329 = scalar_select %p328, %s21, 1
      %p330 = scmp.lt.s32.totalorder %s327, 15
      %s331 = scalar_select %p330, %s327, 15
      %p332 = scmp.lt.s32.totalorder %s23, 0
      %s333 = scalar_select %p332, %s23, 0
      %s334 = smul.addr %s331, 2
      %s335 = sadd.s32 %s333, %s334
      %s336 = smul.addr %s329, 32
      %s337 = sadd.s32 %s335, %s336
      %s338 = smul.addr %s337, 8
      %s339 = scalar_lea.vmem %s5, %s338
      %s340 = smul.u32 16, %s22
      %v341 = vld [vmem:[%s312] sm:$0xff]
      %v342 = vld [vmem:[%s312 + $0x8] sm:$0xff]
      %v343 = vld [vmem:[%s312 + $0x10] sm:$0xff]
      %v344 = vld [vmem:[%s312 + $0x18] sm:$0xff]
      %v345 = vld [vmem:[%s312 + $0x20] sm:$0xff]
      %v346 = vld [vmem:[%s312 + $0x28] sm:$0xff]
      %v347 = vld [vmem:[%s312 + $0x30] sm:$0xff]
      %v348 = vld [vmem:[%s312 + $0x38] sm:$0xff]
      %v349 = vld [vmem:[%s312 + $0x40] sm:$0xff]
      %v350 = vld [vmem:[%s312 + $0x48] sm:$0xff]
      %v351 = vld [vmem:[%s312 + $0x50] sm:$0xff]
      %v352 = vld [vmem:[%s312 + $0x58] sm:$0xff]
      %v353 = vld [vmem:[%s312 + $0x60] sm:$0xff]
      %v354 = vld [vmem:[%s312 + $0x68] sm:$0xff]
      %v355 = vld [vmem:[%s312 + $0x70] sm:$0xff]
      %v356 = vld [vmem:[%s312 + $0x78] sm:$0xff]
      %v357 = vld [vmem:[%s312 + $0x80] sm:$0xff]
      %v358 = vld [vmem:[%s312 + $0x88] sm:$0xff]
      %v359 = vld [vmem:[%s312 + $0x90] sm:$0xff]
      %v360 = vld [vmem:[%s312 + $0x98] sm:$0xff]
      %v361 = vld [vmem:[%s312 + $0xa0] sm:$0xff]
      %v362 = vld [vmem:[%s312 + $0xa8] sm:$0xff]
      %v363 = vld [vmem:[%s312 + $0xb0] sm:$0xff]
      %v364 = vld [vmem:[%s312 + $0xb8] sm:$0xff]
      %v365 = vld [vmem:[%s312 + $0xc0] sm:$0xff]
      %v366 = vld [vmem:[%s312 + $0xc8] sm:$0xff]
      %v367 = vld [vmem:[%s312 + $0xd0] sm:$0xff]
      %v368 = vld [vmem:[%s312 + $0xd8] sm:$0xff]
      %v369 = vld [vmem:[%s312 + $0xe0] sm:$0xff]
      %v370 = vld [vmem:[%s312 + $0xe8] sm:$0xff]
      %v371 = vld [vmem:[%s312 + $0xf0] sm:$0xff]
      %v372 = vld [vmem:[%s312 + $0xf8] sm:$0xff]
      %v373 = vld [vmem:[%s312 + $0x100] sm:$0xff]
      %v374 = vld [vmem:[%s312 + $0x108] sm:$0xff]
      %v375 = vld [vmem:[%s312 + $0x110] sm:$0xff]
      %v376 = vld [vmem:[%s312 + $0x118] sm:$0xff]
      %v377 = vld [vmem:[%s312 + $0x120] sm:$0xff]
      %v378 = vld [vmem:[%s312 + $0x128] sm:$0xff]
      %v379 = vld [vmem:[%s312 + $0x130] sm:$0xff]
      %v380 = vld [vmem:[%s312 + $0x138] sm:$0xff]
      %v381 = vld [vmem:[%s312 + $0x140] sm:$0xff]
      %v382 = vld [vmem:[%s312 + $0x148] sm:$0xff]
      %v383 = vld [vmem:[%s312 + $0x150] sm:$0xff]
      %v384 = vld [vmem:[%s312 + $0x158] sm:$0xff]
      %v385 = vld [vmem:[%s312 + $0x160] sm:$0xff]
      %v386 = vld [vmem:[%s312 + $0x168] sm:$0xff]
      %v387 = vld [vmem:[%s312 + $0x170] sm:$0xff]
      %v388 = vld [vmem:[%s312 + $0x178] sm:$0xff]
      %v389 = vld [vmem:[%s312 + $0x180] sm:$0xff]
      %v390 = vld [vmem:[%s312 + $0x188] sm:$0xff]
      %v391 = vld [vmem:[%s312 + $0x190] sm:$0xff]
      %v392 = vld [vmem:[%s312 + $0x198] sm:$0xff]
      %v393 = vld [vmem:[%s312 + $0x1a0] sm:$0xff]
      %v394 = vld [vmem:[%s312 + $0x1a8] sm:$0xff]
      %v395 = vld [vmem:[%s316] sm:$0xff]
      %v396 = vld [vmem:[%s319] sm:$0x1]
      %v398 = vlaneseq
      %v399 = vshrl.u32 %v398, 7
      %v400 = vsub.s32 0, %v399
      %v401 = vrot.slane %v396, %v400
      %vm403 = vcmask 64512
      %v405 = vsel %vm403, %v341, 0
      %v408 = vsel %vm403, %v342, 0
      %v411 = vsel %vm403, %v343, 0
      %v414 = vsel %vm403, %v344, 0
      %v417 = vsel %vm403, %v345, 0
      %v420 = vsel %vm403, %v346, 0
      %v423 = vsel %vm403, %v347, 0
      %v426 = vsel %vm403, %v348, 0
      %v429 = vsel %vm403, %v349, 0
      %v432 = vsel %vm403, %v350, 0
      %v435 = vsel %vm403, %v351, 0
      %v438 = vsel %vm403, %v352, 0
      %v441 = vsel %vm403, %v353, 0
      %v444 = vsel %vm403, %v354, 0
      %v447 = vsel %vm403, %v355, 0
      %v450 = vsel %vm403, %v356, 0
      %v453 = vsel %vm403, %v357, 0
      %v456 = vsel %vm403, %v358, 0
      %v459 = vsel %vm403, %v359, 0
      %v462 = vsel %vm403, %v360, 0
      %v465 = vsel %vm403, %v361, 0
      %v468 = vsel %vm403, %v362, 0
      %v471 = vsel %vm403, %v363, 0
      %v474 = vsel %vm403, %v364, 0
      %v477 = vsel %vm403, %v365, 0
      %v480 = vsel %vm403, %v366, 0
      %v483 = vsel %vm403, %v367, 0
      %v486 = vsel %vm403, %v368, 0
      %v489 = vsel %vm403, %v369, 0
      %v492 = vsel %vm403, %v370, 0
      %v495 = vsel %vm403, %v371, 0
      %v498 = vsel %vm403, %v372, 0
      %v501 = vsel %vm403, %v373, 0
      %v504 = vsel %vm403, %v374, 0
      %v507 = vsel %vm403, %v375, 0
      %v510 = vsel %vm403, %v376, 0
      %v513 = vsel %vm403, %v377, 0
      %v516 = vsel %vm403, %v378, 0
      %v519 = vsel %vm403, %v379, 0
      %v522 = vsel %vm403, %v380, 0
      %v525 = vsel %vm403, %v381, 0
      %v528 = vsel %vm403, %v382, 0
      %v531 = vsel %vm403, %v383, 0
      %v534 = vsel %vm403, %v384, 0
      %v537 = vsel %vm403, %v385, 0
      %v540 = vsel %vm403, %v386, 0
      %v543 = vsel %vm403, %v387, 0
      %v546 = vsel %vm403, %v388, 0
      %v549 = vsel %vm403, %v389, 0
      %v552 = vsel %vm403, %v390, 0
      %v555 = vsel %vm403, %v391, 0
      %v558 = vsel %vm403, %v392, 0
      %v561 = vsel %vm403, %v393, 0
      %v564 = vsel %vm403, %v394, 0
      %566 = vmatprep.subr.mxu0 0.0
      %567 = vmatpush1.msra.mxu0 %v395
      %568 = vmatprep.subr.mxu0 0.0
      %569 = vmatpush1.msra.mxu0 0.0
      %570 = vmatprep.subr.mxu0 0.0
      %571 = vmatpush1.msra.mxu0 0.0
      %572 = vmatprep.subr.mxu0 0.0
      %573 = vmatpush1.msra.mxu0 0.0
      %574 = vmatprep.subr.mxu0 0.0
      %575 = vmatpush1.msra.mxu0 0.0
      %576 = vmatprep.subr.mxu0 0.0
      %577 = vmatpush1.msra.mxu0 0.0
      %578 = vmatprep.subr.mxu0 0.0
      %579 = vmatpush1.msra.mxu0 0.0
      %580 = vmatprep.subr.mxu0 0.0
      %581 = vmatpush1.msra.mxu0 0.0
      %582 = vmatprep.subr.mxu0 0.0
      %583 = vmatpush1.msra.mxu0 0.0
      %584 = vmatprep.subr.mxu0 0.0
      %585 = vmatpush1.msra.mxu0 0.0
      %586 = vmatprep.subr.mxu0 0.0
      %587 = vmatpush1.msra.mxu0 0.0
      %588 = vmatprep.subr.mxu0 0.0
      %589 = vmatpush1.msra.mxu0 0.0
      %590 = vmatprep.subr.mxu0 0.0
      %591 = vmatpush1.msra.mxu0 0.0
      %592 = vmatprep.subr.mxu0 0.0
      %593 = vmatpush1.msra.mxu0 0.0
      %594 = vmatprep.subr.mxu0 0.0
      %595 = vmatpush1.msra.mxu0 0.0
      %596 = vmatprep.subr.mxu0 0.0
      %597 = vmatpush1.msra.mxu0 0.0
      %598 = vmatprep.subr.mxu0 0.0
      %599 = vmatpush1.msra.mxu0 0.0
      %600 = vmatprep.subr.mxu0 0.0
      %601 = vmatpush1.msra.mxu0 0.0
      %602 = vmatprep.subr.mxu0 0.0
      %603 = vmatpush1.msra.mxu0 0.0
      %604 = vmatprep.subr.mxu0 0.0
      %605 = vmatpush1.msra.mxu0 0.0
      %606 = vmatprep.subr.mxu0 0.0
      %607 = vmatpush1.msra.mxu0 0.0
      %608 = vmatprep.subr.mxu0 0.0
      %609 = vmatpush1.msra.mxu0 0.0
      %610 = vmatprep.subr.mxu0 0.0
      %611 = vmatpush1.msra.mxu0 0.0
      %612 = vmatprep.subr.mxu0 0.0
      %613 = vmatpush1.msra.mxu0 0.0
      %614 = vmatprep.subr.mxu0 0.0
      %615 = vmatpush1.msra.mxu0 0.0
      %616 = vmatprep.subr.mxu0 0.0
      %617 = vmatpush1.msra.mxu0 0.0
      %618 = vmatprep.subr.mxu0 0.0
      %619 = vmatpush1.msra.mxu0 0.0
      %620 = vmatprep.subr.mxu0 0.0
      %621 = vmatpush1.msra.mxu0 0.0
      %622 = vmatprep.subr.mxu0 0.0
      %623 = vmatpush1.msra.mxu0 0.0
      %624 = vmatprep.subr.mxu0 0.0
      %625 = vmatpush1.msra.mxu0 0.0
      %626 = vmatprep.subr.mxu0 0.0
      %627 = vmatpush1.msra.mxu0 0.0
      %628 = vmatprep.subr.mxu0 0.0
      %629 = vmatpush1.msra.mxu0 0.0
      %630 = vmatprep.mubr.f32.mxu0 0.0
      %631 = vmatmul.mubr.f32.gmra.mrb[0].mxu0 %v405
      %v632 = vpop.f32.mrb[0].mxu0
      %v633 = vadd.f32 %v401, %v632
      %v634 = vpop.f32.mrb[0].mxu0
      %635 = vmatprep.mubr.f32.mxu0 0.0
      %636 = vmatmul.mubr.f32.gmra.mrb[0].mxu0 %v408
      %v637 = vpop.f32.mrb[0].mxu0
      %v638 = vadd.f32 %v401, %v637
      %v639 = vpop.f32.mrb[0].mxu0
      %640 = vmatprep.mubr.f32.mxu0 0.0
      %641 = vmatmul.mubr.f32.gmra.mrb[0].mxu0 %v411
      %v642 = vpop.f32.mrb[0].mxu0
      %v643 = vadd.f32 %v401, %v642
      %v644 = vpop.f32.mrb[0].mxu0
      %645 = vmatprep.mubr.f32.mxu0 0.0
      %646 = vmatmul.mubr.f32.gmra.mrb[0].mxu0 %v414
      %v647 = vpop.f32.mrb[0].mxu0
      %v648 = vadd.f32 %v401, %v647
      %v649 = vpop.f32.mrb[0].mxu0
      %650 = vmatprep.mubr.f32.mxu0 0.0
      %651 = vmatmul.mubr.f32.gmra.mrb[0].mxu0 %v417
      %v652 = vpop.f32.mrb[0].mxu0
      %v653 = vadd.f32 %v401, %v652
      %v654 = vpop.f32.mrb[0].mxu0
      %655 = vmatprep.mubr.f32.mxu0 0.0
      %656 = vmatmul.mubr.f32.gmra.mrb[0].mxu0 %v420
      %v657 = vpop.f32.mrb[0].mxu0
      %v658 = vadd.f32 %v401, %v657
      %v659 = vpop.f32.mrb[0].mxu0
      %660 = vmatprep.mubr.f32.mxu0 0.0
      %661 = vmatmul.mubr.f32.gmra.mrb[0].mxu0 %v423
      %v662 = vpop.f32.mrb[0].mxu0
      %v663 = vadd.f32 %v401, %v662
      %v664 = vpop.f32.mrb[0].mxu0
      %665 = vmatprep.mubr.f32.mxu0 0.0
      %666 = vmatmul.mubr.f32.gmra.mrb[0].mxu0 %v426
      %v667 = vpop.f32.mrb[0].mxu0
      %v668 = vadd.f32 %v401, %v667
      %v669 = vpop.f32.mrb[0].mxu0
      %670 = vmatprep.mubr.f32.mxu0 0.0
      %671 = vmatmul.mubr.f32.gmra.mrb[0].mxu0 %v429
      %v672 = vpop.f32.mrb[0].mxu0
      %v673 = vadd.f32 %v401, %v672
      %v674 = vpop.f32.mrb[0].mxu0
      %675 = vmatprep.mubr.f32.mxu0 0.0
      %676 = vmatmul.mubr.f32.gmra.mrb[0].mxu0 %v432
      %v677 = vpop.f32.mrb[0].mxu0
      %v678 = vadd.f32 %v401, %v677
      %v679 = vpop.f32.mrb[0].mxu0
      %680 = vmatprep.mubr.f32.mxu0 0.0
      %681 = vmatmul.mubr.f32.gmra.mrb[0].mxu0 %v435
      %v682 = vpop.f32.mrb[0].mxu0
      %v683 = vadd.f32 %v401, %v682
      %v684 = vpop.f32.mrb[0].mxu0
      %685 = vmatprep.mubr.f32.mxu0 0.0
      %686 = vmatmul.mubr.f32.gmra.mrb[0].mxu0 %v438
      %v687 = vpop.f32.mrb[0].mxu0
      %v688 = vadd.f32 %v401, %v687
      %v689 = vpop.f32.mrb[0].mxu0
      %690 = vmatprep.mubr.f32.mxu0 0.0
      %691 = vmatmul.mubr.f32.gmra.mrb[0].mxu0 %v441
      %v692 = vpop.f32.mrb[0].mxu0
      %v693 = vadd.f32 %v401, %v692
      %v694 = vpop.f32.mrb[0].mxu0
      %695 = vmatprep.mubr.f32.mxu0 0.0
      %696 = vmatmul.mubr.f32.gmra.mrb[0].mxu0 %v444
      %v697 = vpop.f32.mrb[0].mxu0
      %v698 = vadd.f32 %v401, %v697
      %v699 = vpop.f32.mrb[0].mxu0
      %700 = vmatprep.mubr.f32.mxu0 0.0
      %701 = vmatmul.mubr.f32.gmra.mrb[0].mxu0 %v447
      %v702 = vpop.f32.mrb[0].mxu0
      %v703 = vadd.f32 %v401, %v702
      %v704 = vpop.f32.mrb[0].mxu0
      %705 = vmatprep.mubr.f32.mxu0 0.0
      %706 = vmatmul.mubr.f32.gmra.mrb[0].mxu0 %v450
      %v707 = vpop.f32.mrb[0].mxu0
      %v708 = vadd.f32 %v401, %v707
      %v709 = vpop.f32.mrb[0].mxu0
      %710 = vmatprep.mubr.f32.mxu0 0.0
      %711 = vmatmul.mubr.f32.gmra.mrb[0].mxu0 %v453
      %v712 = vpop.f32.mrb[0].mxu0
      %v713 = vadd.f32 %v401, %v712
      %v714 = vpop.f32.mrb[0].mxu0
      %715 = vmatprep.mubr.f32.mxu0 0.0
      %716 = vmatmul.mubr.f32.gmra.mrb[0].mxu0 %v456
      %v717 = vpop.f32.mrb[0].mxu0
      %v718 = vadd.f32 %v401, %v717
      %v719 = vpop.f32.mrb[0].mxu0
      %720 = vmatprep.mubr.f32.mxu0 0.0
      %721 = vmatmul.mubr.f32.gmra.mrb[0].mxu0 %v459
      %v722 = vpop.f32.mrb[0].mxu0
      %v723 = vadd.f32 %v401, %v722
      %v724 = vpop.f32.mrb[0].mxu0
      %725 = vmatprep.mubr.f32.mxu0 0.0
      %726 = vmatmul.mubr.f32.gmra.mrb[0].mxu0 %v462
      %v727 = vpop.f32.mrb[0].mxu0
      %v728 = vadd.f32 %v401, %v727
      %v729 = vpop.f32.mrb[0].mxu0
      %730 = vmatprep.mubr.f32.mxu0 0.0
      %731 = vmatmul.mubr.f32.gmra.mrb[0].mxu0 %v465
      %v732 = vpop.f32.mrb[0].mxu0
      %v733 = vadd.f32 %v401, %v732
      %v734 = vpop.f32.mrb[0].mxu0
      %735 = vmatprep.mubr.f32.mxu0 0.0
      %736 = vmatmul.mubr.f32.gmra.mrb[0].mxu0 %v468
      %v737 = vpop.f32.mrb[0].mxu0
      %v738 = vadd.f32 %v401, %v737
      %v739 = vpop.f32.mrb[0].mxu0
      %740 = vmatprep.mubr.f32.mxu0 0.0
      %741 = vmatmul.mubr.f32.gmra.mrb[0].mxu0 %v471
      %v742 = vpop.f32.mrb[0].mxu0
      %v743 = vadd.f32 %v401, %v742
      %v744 = vpop.f32.mrb[0].mxu0
      %745 = vmatprep.mubr.f32.mxu0 0.0
      %746 = vmatmul.mubr.f32.gmra.mrb[0].mxu0 %v474
      %v747 = vpop.f32.mrb[0].mxu0
      %v748 = vadd.f32 %v401, %v747
      %v749 = vpop.f32.mrb[0].mxu0
      %750 = vmatprep.mubr.f32.mxu0 0.0
      %751 = vmatmul.mubr.f32.gmra.mrb[0].mxu0 %v477
      %v752 = vpop.f32.mrb[0].mxu0
      %v753 = vadd.f32 %v401, %v752
      %v754 = vpop.f32.mrb[0].mxu0
      %755 = vmatprep.mubr.f32.mxu0 0.0
      %756 = vmatmul.mubr.f32.gmra.mrb[0].mxu0 %v480
      %v757 = vpop.f32.mrb[0].mxu0
      %v758 = vadd.f32 %v401, %v757
      %v759 = vpop.f32.mrb[0].mxu0
      %760 = vmatprep.mubr.f32.mxu0 0.0
      %761 = vmatmul.mubr.f32.gmra.mrb[0].mxu0 %v483
      %v762 = vpop.f32.mrb[0].mxu0
      %v763 = vadd.f32 %v401, %v762
      %v764 = vpop.f32.mrb[0].mxu0
      %765 = vmatprep.mubr.f32.mxu0 0.0
      %766 = vmatmul.mubr.f32.gmra.mrb[0].mxu0 %v486
      %v767 = vpop.f32.mrb[0].mxu0
      %v768 = vadd.f32 %v401, %v767
      %v769 = vpop.f32.mrb[0].mxu0
      %770 = vmatprep.mubr.f32.mxu0 0.0
      %771 = vmatmul.mubr.f32.gmra.mrb[0].mxu0 %v489
      %v772 = vpop.f32.mrb[0].mxu0
      %v773 = vadd.f32 %v401, %v772
      %v774 = vpop.f32.mrb[0].mxu0
      %775 = vmatprep.mubr.f32.mxu0 0.0
      %776 = vmatmul.mubr.f32.gmra.mrb[0].mxu0 %v492
      %v777 = vpop.f32.mrb[0].mxu0
      %v778 = vadd.f32 %v401, %v777
      %v779 = vpop.f32.mrb[0].mxu0
      %780 = vmatprep.mubr.f32.mxu0 0.0
      %781 = vmatmul.mubr.f32.gmra.mrb[0].mxu0 %v495
      %v782 = vpop.f32.mrb[0].mxu0
      %v783 = vadd.f32 %v401, %v782
      %v784 = vpop.f32.mrb[0].mxu0
      %785 = vmatprep.mubr.f32.mxu0 0.0
      %786 = vmatmul.mubr.f32.gmra.mrb[0].mxu0 %v498
      %v787 = vpop.f32.mrb[0].mxu0
      %v788 = vadd.f32 %v401, %v787
      %v789 = vpop.f32.mrb[0].mxu0
      %790 = vmatprep.mubr.f32.mxu0 0.0
      %791 = vmatmul.mubr.f32.gmra.mrb[0].mxu0 %v501
      %v792 = vpop.f32.mrb[0].mxu0
      %v793 = vadd.f32 %v401, %v792
      %v794 = vpop.f32.mrb[0].mxu0
      %795 = vmatprep.mubr.f32.mxu0 0.0
      %796 = vmatmul.mubr.f32.gmra.mrb[0].mxu0 %v504
      %v797 = vpop.f32.mrb[0].mxu0
      %v798 = vadd.f32 %v401, %v797
      %v799 = vpop.f32.mrb[0].mxu0
      %800 = vmatprep.mubr.f32.mxu0 0.0
      %801 = vmatmul.mubr.f32.gmra.mrb[0].mxu0 %v507
      %v802 = vpop.f32.mrb[0].mxu0
      %v803 = vadd.f32 %v401, %v802
      %v804 = vpop.f32.mrb[0].mxu0
      %805 = vmatprep.mubr.f32.mxu0 0.0
      %806 = vmatmul.mubr.f32.gmra.mrb[0].mxu0 %v510
      %v807 = vpop.f32.mrb[0].mxu0
      %v808 = vadd.f32 %v401, %v807
      %v809 = vpop.f32.mrb[0].mxu0
      %810 = vmatprep.mubr.f32.mxu0 0.0
      %811 = vmatmul.mubr.f32.gmra.mrb[0].mxu0 %v513
      %v812 = vpop.f32.mrb[0].mxu0
      %v813 = vadd.f32 %v401, %v812
      %v814 = vpop.f32.mrb[0].mxu0
      %815 = vmatprep.mubr.f32.mxu0 0.0
      %816 = vmatmul.mubr.f32.gmra.mrb[0].mxu0 %v516
      %v817 = vpop.f32.mrb[0].mxu0
      %v818 = vadd.f32 %v401, %v817
      %v819 = vpop.f32.mrb[0].mxu0
      %820 = vmatprep.mubr.f32.mxu0 0.0
      %821 = vmatmul.mubr.f32.gmra.mrb[0].mxu0 %v519
      %v822 = vpop.f32.mrb[0].mxu0
      %v823 = vadd.f32 %v401, %v822
      %v824 = vpop.f32.mrb[0].mxu0
      %825 = vmatprep.mubr.f32.mxu0 0.0
      %826 = vmatmul.mubr.f32.gmra.mrb[0].mxu0 %v522
      %v827 = vpop.f32.mrb[0].mxu0
      %v828 = vadd.f32 %v401, %v827
      %v829 = vpop.f32.mrb[0].mxu0
      %830 = vmatprep.mubr.f32.mxu0 0.0
      %831 = vmatmul.mubr.f32.gmra.mrb[0].mxu0 %v525
      %v832 = vpop.f32.mrb[0].mxu0
      %v833 = vadd.f32 %v401, %v832
      %v834 = vpop.f32.mrb[0].mxu0
      %835 = vmatprep.mubr.f32.mxu0 0.0
      %836 = vmatmul.mubr.f32.gmra.mrb[0].mxu0 %v528
      %v837 = vpop.f32.mrb[0].mxu0
      %v838 = vadd.f32 %v401, %v837
      %v839 = vpop.f32.mrb[0].mxu0
      %840 = vmatprep.mubr.f32.mxu0 0.0
      %841 = vmatmul.mubr.f32.gmra.mrb[0].mxu0 %v531
      %v842 = vpop.f32.mrb[0].mxu0
      %v843 = vadd.f32 %v401, %v842
      %v844 = vpop.f32.mrb[0].mxu0
      %845 = vmatprep.mubr.f32.mxu0 0.0
      %846 = vmatmul.mubr.f32.gmra.mrb[0].mxu0 %v534
      %v847 = vpop.f32.mrb[0].mxu0
      %v848 = vadd.f32 %v401, %v847
      %v849 = vpop.f32.mrb[0].mxu0
      %850 = vmatprep.mubr.f32.mxu0 0.0
      %851 = vmatmul.mubr.f32.gmra.mrb[0].mxu0 %v537
      %v852 = vpop.f32.mrb[0].mxu0
      %v853 = vadd.f32 %v401, %v852
      %v854 = vpop.f32.mrb[0].mxu0
      %855 = vmatprep.mubr.f32.mxu0 0.0
      %856 = vmatmul.mubr.f32.gmra.mrb[0].mxu0 %v540
      %v857 = vpop.f32.mrb[0].mxu0
      %v858 = vadd.f32 %v401, %v857
      %v859 = vpop.f32.mrb[0].mxu0
      %860 = vmatprep.mubr.f32.mxu0 0.0
      %861 = vmatmul.mubr.f32.gmra.mrb[0].mxu0 %v543
      %v862 = vpop.f32.mrb[0].mxu0
      %v863 = vadd.f32 %v401, %v862
      %v864 = vpop.f32.mrb[0].mxu0
      %865 = vmatprep.mubr.f32.mxu0 0.0
      %866 = vmatmul.mubr.f32.gmra.mrb[0].mxu0 %v546
      %v867 = vpop.f32.mrb[0].mxu0
      %v868 = vadd.f32 %v401, %v867
      %v869 = vpop.f32.mrb[0].mxu0
      %870 = vmatprep.mubr.f32.mxu0 0.0
      %871 = vmatmul.mubr.f32.gmra.mrb[0].mxu0 %v549
      %v872 = vpop.f32.mrb[0].mxu0
      %v873 = vadd.f32 %v401, %v872
      %v874 = vpop.f32.mrb[0].mxu0
      %875 = vmatprep.mubr.f32.mxu0 0.0
      %876 = vmatmul.mubr.f32.gmra.mrb[0].mxu0 %v552
      %v877 = vpop.f32.mrb[0].mxu0
      %v878 = vadd.f32 %v401, %v877
      %v879 = vpop.f32.mrb[0].mxu0
      %880 = vmatprep.mubr.f32.mxu0 0.0
      %881 = vmatmul.mubr.f32.gmra.mrb[0].mxu0 %v555
      %v882 = vpop.f32.mrb[0].mxu0
      %v883 = vadd.f32 %v401, %v882
      %v884 = vpop.f32.mrb[0].mxu0
      %885 = vmatprep.mubr.f32.mxu0 0.0
      %886 = vmatmul.mubr.f32.gmra.mrb[0].mxu0 %v558
      %v887 = vpop.f32.mrb[0].mxu0
      %v888 = vadd.f32 %v401, %v887
      %v889 = vpop.f32.mrb[0].mxu0
      %890 = vmatprep.mubr.f32.mxu0 0.0
      %891 = vmatmul.mubr.f32.gmra.mrb[0].mxu0 %v561
      %v892 = vpop.f32.mrb[0].mxu0
      %v893 = vadd.f32 %v401, %v892
      %v894 = vpop.f32.mrb[0].mxu0
      %895 = vmatprep.mubr.f32.mxu0 0.0
      %896 = vmatmul.mubr.f32.gmra.mrb[0].mxu0 %v564
      %v897 = vpop.f32.mrb[0].mxu0
      %v898 = vadd.f32 %v401, %v897
      %v899 = vpop.f32.mrb[0].mxu0
      %900 = vdwg.mxu0
      %901 = vst [vmem:[#allocation2] sm:$0xff] %v633
      %902 = vst [vmem:[#allocation2 + $0x8] sm:$0xff] %v638
      %903 = vst [vmem:[#allocation2 + $0x10] sm:$0xff] %v648
      %904 = vst [vmem:[#allocation2 + $0x18] sm:$0xff] %v653
      %905 = vst [vmem:[#allocation2 + $0x20] sm:$0xff] %v663
      %906 = vst [vmem:[#allocation2 + $0x28] sm:$0xff] %v668
      %907 = vst [vmem:[#allocation2 + $0x30] sm:$0xff] %v678
      %908 = vst [vmem:[#allocation2 + $0x38] sm:$0xff] %v683
      %909 = vst [vmem:[#allocation2 + $0x40] sm:$0xff] %v693
      %910 = vst [vmem:[#allocation2 + $0x48] sm:$0xff] %v698
      %911 = vst [vmem:[#allocation2 + $0x50] sm:$0xff] %v708
      %912 = vst [vmem:[#allocation2 + $0x58] sm:$0xff] %v713
      %913 = vst [vmem:[#allocation2 + $0x60] sm:$0xff] %v723
      %914 = vst [vmem:[#allocation2 + $0x68] sm:$0xff] %v728
      %915 = vst [vmem:[#allocation2 + $0x70] sm:$0xff] %v738
      %916 = vst [vmem:[#allocation2 + $0x78] sm:$0xff] %v743
      %917 = vst [vmem:[#allocation2 + $0x80] sm:$0xff] %v753
      %918 = vst [vmem:[#allocation2 + $0x88] sm:$0xff] %v758
      %919 = vst [vmem:[#allocation2 + $0x90] sm:$0xff] %v768
      %920 = vst [vmem:[#allocation2 + $0x98] sm:$0xff] %v773
      %921 = vst [vmem:[#allocation2 + $0xa0] sm:$0xff] %v783
      %922 = vst [vmem:[#allocation2 + $0xa8] sm:$0xff] %v788
      %923 = vst [vmem:[#allocation2 + $0xb0] sm:$0xff] %v798
      %924 = vst [vmem:[#allocation2 + $0xb8] sm:$0xff] %v803
      %925 = vst [vmem:[#allocation2 + $0xc0] sm:$0xff] %v813
      %926 = vst [vmem:[#allocation2 + $0xc8] sm:$0xff] %v818
      %927 = vst [vmem:[#allocation2 + $0xd0] sm:$0xff] %v828
      %928 = vst [vmem:[#allocation2 + $0xd8] sm:$0xff] %v833
      %929 = vst [vmem:[#allocation2 + $0xe0] sm:$0xff] %v843
      %930 = vst [vmem:[#allocation2 + $0xe8] sm:$0xff] %v848
      %931 = vst [vmem:[#allocation2 + $0xf0] sm:$0xff] %v858
      %932 = vst [vmem:[#allocation2 + $0xf8] sm:$0xff] %v863
      %933 = vst [vmem:[#allocation2 + $0x100] sm:$0xff] %v873
      %934 = vst [vmem:[#allocation2 + $0x108] sm:$0xff] %v878
      %935 = vst [vmem:[#allocation2 + $0x110] sm:$0xff] %v888
      %936 = vst [vmem:[#allocation2 + $0x118] sm:$0xff] %v893
      %937 = vst [vmem:[#allocation3 - $0x1] sm:$0xfe] %v633
      %938 = vst [vmem:[#allocation3 + $0x7] sm:$0xff] %v638
      %939 = vst [vmem:[#allocation3 + $0xf] sm:$0x1] %v643
      %940 = vst [vmem:[#allocation3 + $0xf] sm:$0xfe] %v648
      %941 = vst [vmem:[#allocation3 + $0x17] sm:$0xff] %v653
      %942 = vst [vmem:[#allocation3 + $0x1f] sm:$0x1] %v658
      %943 = vst [vmem:[#allocation3 + $0x1f] sm:$0xfe] %v663
      %944 = vst [vmem:[#allocation3 + $0x27] sm:$0xff] %v668
      %945 = vst [vmem:[#allocation3 + $0x2f] sm:$0x1] %v673
      %946 = vst [vmem:[#allocation3 + $0x2f] sm:$0xfe] %v678
      %947 = vst [vmem:[#allocation3 + $0x37] sm:$0xff] %v683
      %948 = vst [vmem:[#allocation3 + $0x3f] sm:$0x1] %v688
      %949 = vst [vmem:[#allocation3 + $0x3f] sm:$0xfe] %v693
      %950 = vst [vmem:[#allocation3 + $0x47] sm:$0xff] %v698
      %951 = vst [vmem:[#allocation3 + $0x4f] sm:$0x1] %v703
      %952 = vst [vmem:[#allocation3 + $0x4f] sm:$0xfe] %v708
      %953 = vst [vmem:[#allocation3 + $0x57] sm:$0xff] %v713
      %954 = vst [vmem:[#allocation3 + $0x5f] sm:$0x1] %v718
      %955 = vst [vmem:[#allocation3 + $0x5f] sm:$0xfe] %v723
      %956 = vst [vmem:[#allocation3 + $0x67] sm:$0xff] %v728
      %957 = vst [vmem:[#allocation3 + $0x6f] sm:$0x1] %v733
      %958 = vst [vmem:[#allocation3 + $0x6f] sm:$0xfe] %v738
      %959 = vst [vmem:[#allocation3 + $0x77] sm:$0xff] %v743
      %960 = vst [vmem:[#allocation3 + $0x7f] sm:$0x1] %v748
      %961 = vst [vmem:[#allocation3 + $0x7f] sm:$0xfe] %v753
      %962 = vst [vmem:[#allocation3 + $0x87] sm:$0xff] %v758
      %963 = vst [vmem:[#allocation3 + $0x8f] sm:$0x1] %v763
      %964 = vst [vmem:[#allocation3 + $0x8f] sm:$0xfe] %v768
      %965 = vst [vmem:[#allocation3 + $0x97] sm:$0xff] %v773
      %966 = vst [vmem:[#allocation3 + $0x9f] sm:$0x1] %v778
      %967 = vst [vmem:[#allocation3 + $0x9f] sm:$0xfe] %v783
      %968 = vst [vmem:[#allocation3 + $0xa7] sm:$0xff] %v788
      %969 = vst [vmem:[#allocation3 + $0xaf] sm:$0x1] %v793
      %970 = vst [vmem:[#allocation3 + $0xaf] sm:$0xfe] %v798
      %971 = vst [vmem:[#allocation3 + $0xb7] sm:$0xff] %v803
      %972 = vst [vmem:[#allocation3 + $0xbf] sm:$0x1] %v808
      %973 = vst [vmem:[#allocation3 + $0xbf] sm:$0xfe] %v813
      %974 = vst [vmem:[#allocation3 + $0xc7] sm:$0xff] %v818
      %975 = vst [vmem:[#allocation3 + $0xcf] sm:$0x1] %v823
      %976 = vst [vmem:[#allocation3 + $0xcf] sm:$0xfe] %v828
      %977 = vst [vmem:[#allocation3 + $0xd7] sm:$0xff] %v833
      %978 = vst [vmem:[#allocation3 + $0xdf] sm:$0x1] %v838
      %979 = vst [vmem:[#allocation3 + $0xdf] sm:$0xfe] %v843
      %980 = vst [vmem:[#allocation3 + $0xe7] sm:$0xff] %v848
      %981 = vst [vmem:[#allocation3 + $0xef] sm:$0x1] %v853
      %982 = vst [vmem:[#allocation3 + $0xef] sm:$0xfe] %v858
      %983 = vst [vmem:[#allocation3 + $0xf7] sm:$0xff] %v863
      %984 = vst [vmem:[#allocation3 + $0xff] sm:$0x1] %v868
      %985 = vst [vmem:[#allocation3 + $0xff] sm:$0xfe] %v873
      %986 = vst [vmem:[#allocation3 + $0x107] sm:$0xff] %v878
      %987 = vst [vmem:[#allocation3 + $0x10f] sm:$0x1] %v883
      %988 = vst [vmem:[#allocation3 + $0x10f] sm:$0xfe] %v888
      %989 = vst [vmem:[#allocation3 + $0x117] sm:$0xff] %v893
      %990 = vst [vmem:[#allocation3 + $0x11f] sm:$0x1] %v898
      %991 = vst [vmem:[#allocation4 - $0x2] sm:$0xfc] %v633
      %992 = vst [vmem:[#allocation4 + $0x6] sm:$0xff] %v638
      %993 = vst [vmem:[#allocation4 + $0xe] sm:$0x3] %v643
      %994 = vst [vmem:[#allocation4 + $0xe] sm:$0xfc] %v648
      %995 = vst [vmem:[#allocation4 + $0x16] sm:$0xff] %v653
      %996 = vst [vmem:[#allocation4 + $0x1e] sm:$0x3] %v658
      %997 = vst [vmem:[#allocation4 + $0x1e] sm:$0xfc] %v663
      %998 = vst [vmem:[#allocation4 + $0x26] sm:$0xff] %v668
      %999 = vst [vmem:[#allocation4 + $0x2e] sm:$0x3] %v673
      %1000 = vst [vmem:[#allocation4 + $0x2e] sm:$0xfc] %v678
      %1001 = vst [vmem:[#allocation4 + $0x36] sm:$0xff] %v683
      %1002 = vst [vmem:[#allocation4 + $0x3e] sm:$0x3] %v688
      %1003 = vst [vmem:[#allocation4 + $0x3e] sm:$0xfc] %v693
      %1004 = vst [vmem:[#allocation4 + $0x46] sm:$0xff] %v698
      %1005 = vst [vmem:[#allocation4 + $0x4e] sm:$0x3] %v703
      %1006 = vst [vmem:[#allocation4 + $0x4e] sm:$0xfc] %v708
      %1007 = vst [vmem:[#allocation4 + $0x56] sm:$0xff] %v713
      %1008 = vst [vmem:[#allocation4 + $0x5e] sm:$0x3] %v718
      %1009 = vst [vmem:[#allocation4 + $0x5e] sm:$0xfc] %v723
      %1010 = vst [vmem:[#allocation4 + $0x66] sm:$0xff] %v728
      %1011 = vst [vmem:[#allocation4 + $0x6e] sm:$0x3] %v733
      %1012 = vst [vmem:[#allocation4 + $0x6e] sm:$0xfc] %v738
      %1013 = vst [vmem:[#allocation4 + $0x76] sm:$0xff] %v743
      %1014 = vst [vmem:[#allocation4 + $0x7e] sm:$0x3] %v748
      %1015 = vst [vmem:[#allocation4 + $0x7e] sm:$0xfc] %v753
      %1016 = vst [vmem:[#allocation4 + $0x86] sm:$0xff] %v758
      %1017 = vst [vmem:[#allocation4 + $0x8e] sm:$0x3] %v763
      %1018 = vst [vmem:[#allocation4 + $0x8e] sm:$0xfc] %v768
      %1019 = vst [vmem:[#allocation4 + $0x96] sm:$0xff] %v773
      %1020 = vst [vmem:[#allocation4 + $0x9e] sm:$0x3] %v778
      %1021 = vst [vmem:[#allocation4 + $0x9e] sm:$0xfc] %v783
      %1022 = vst [vmem:[#allocation4 + $0xa6] sm:$0xff] %v788
      %1023 = vst [vmem:[#allocation4 + $0xae] sm:$0x3] %v793
      %1024 = vst [vmem:[#allocation4 + $0xae] sm:$0xfc] %v798
      %1025 = vst [vmem:[#allocation4 + $0xb6] sm:$0xff] %v803
      %1026 = vst [vmem:[#allocation4 + $0xbe] sm:$0x3] %v808
      %1027 = vst [vmem:[#allocation4 + $0xbe] sm:$0xfc] %v813
      %1028 = vst [vmem:[#allocation4 + $0xc6] sm:$0xff] %v818
      %1029 = vst [vmem:[#allocation4 + $0xce] sm:$0x3] %v823
      %1030 = vst [vmem:[#allocation4 + $0xce] sm:$0xfc] %v828
      %1031 = vst [vmem:[#allocation4 + $0xd6] sm:$0xff] %v833
      %1032 = vst [vmem:[#allocation4 + $0xde] sm:$0x3] %v838
      %1033 = vst [vmem:[#allocation4 + $0xde] sm:$0xfc] %v843
      %1034 = vst [vmem:[#allocation4 + $0xe6] sm:$0xff] %v848
      %1035 = vst [vmem:[#allocation4 + $0xee] sm:$0x3] %v853
      %1036 = vst [vmem:[#allocation4 + $0xee] sm:$0xfc] %v858
      %1037 = vst [vmem:[#allocation4 + $0xf6] sm:$0xff] %v863
      %1038 = vst [vmem:[#allocation4 + $0xfe] sm:$0x3] %v868
      %1039 = vst [vmem:[#allocation4 + $0xfe] sm:$0xfc] %v873
      %1040 = vst [vmem:[#allocation4 + $0x106] sm:$0xff] %v878
      %1041 = vst [vmem:[#allocation4 + $0x10e] sm:$0x3] %v883
      %1042 = vst [vmem:[#allocation4 + $0x10e] sm:$0xfc] %v888
      %1043 = vst [vmem:[#allocation4 + $0x116] sm:$0xff] %v893
      %1044 = vst [vmem:[#allocation4 + $0x11e] sm:$0x3] %v898
      %1045 = vst [vmem:[#allocation2] sm:$0x1] 0.0
      %1046 = vst [vmem:[#allocation2 + $0x10] sm:$0x1] 0.0
      %1047 = vst [vmem:[#allocation2 + $0x20] sm:$0x1] 0.0
      %1048 = vst [vmem:[#allocation2 + $0x30] sm:$0x1] 0.0
      %1049 = vst [vmem:[#allocation2 + $0x40] sm:$0x1] 0.0
      %1050 = vst [vmem:[#allocation2 + $0x50] sm:$0x1] 0.0
      %1051 = vst [vmem:[#allocation2 + $0x60] sm:$0x1] 0.0
      %1052 = vst [vmem:[#allocation2 + $0x70] sm:$0x1] 0.0
      %1053 = vst [vmem:[#allocation2 + $0x80] sm:$0x1] 0.0
      %1054 = vst [vmem:[#allocation2 + $0x90] sm:$0x1] 0.0
      %1055 = vst [vmem:[#allocation2 + $0xa0] sm:$0x1] 0.0
      %1056 = vst [vmem:[#allocation2 + $0xb0] sm:$0x1] 0.0
      %1057 = vst [vmem:[#allocation2 + $0xc0] sm:$0x1] 0.0
      %1058 = vst [vmem:[#allocation2 + $0xd0] sm:$0x1] 0.0
      %1059 = vst [vmem:[#allocation2 + $0xe0] sm:$0x1] 0.0
      %1060 = vst [vmem:[#allocation2 + $0xf0] sm:$0x1] 0.0
      %1061 = vst [vmem:[#allocation2 + $0x100] sm:$0x1] 0.0
      %1062 = vst [vmem:[#allocation2 + $0x110] sm:$0x1] 0.0
      %1063 = vst [vmem:[#allocation4 + $0xf] sm:$0x1] 0.0
      %1064 = vst [vmem:[#allocation4 + $0x1f] sm:$0x1] 0.0
      %1065 = vst [vmem:[#allocation4 + $0x2f] sm:$0x1] 0.0
      %1066 = vst [vmem:[#allocation4 + $0x3f] sm:$0x1] 0.0
      %1067 = vst [vmem:[#allocation4 + $0x4f] sm:$0x1] 0.0
      %1068 = vst [vmem:[#allocation4 + $0x5f] sm:$0x1] 0.0
      %1069 = vst [vmem:[#allocation4 + $0x6f] sm:$0x1] 0.0
      %1070 = vst [vmem:[#allocation4 + $0x7f] sm:$0x1] 0.0
      %1071 = vst [vmem:[#allocation4 + $0x8f] sm:$0x1] 0.0
      %1072 = vst [vmem:[#allocation4 + $0x9f] sm:$0x1] 0.0
      %1073 = vst [vmem:[#allocation4 + $0xaf] sm:$0x1] 0.0
      %1074 = vst [vmem:[#allocation4 + $0xbf] sm:$0x1] 0.0
      %1075 = vst [vmem:[#allocation4 + $0xcf] sm:$0x1] 0.0
      %1076 = vst [vmem:[#allocation4 + $0xdf] sm:$0x1] 0.0
      %1077 = vst [vmem:[#allocation4 + $0xef] sm:$0x1] 0.0
      %1078 = vst [vmem:[#allocation4 + $0xff] sm:$0x1] 0.0
      %1079 = vst [vmem:[#allocation4 + $0x10f] sm:$0x1] 0.0
      %1080 = vst [vmem:[#allocation4 + $0x11f] sm:$0x1] 0.0
      %p1081 = scmp.eq.s32.totalorder %s22, 0
      // Predicated region
      $region41: #{light_conv_bn_act.1} parent=39 // pred_check
        %p1082 = pneg %p1081
      $region42: #{light_conv_bn_act.1} parent=39 // pred_check_branch
        %1084 = sbr.rel (%p1082) target = $region44
      $region43: #{light_conv_bn_act.1} parent=39 // pred_region
        %1085 = vst [vmem:[#allocation2] sm:$0xff] 0.0
        %1086 = vst [vmem:[#allocation2 + $0x8] sm:$0xff] 0.0
        %1087 = vst [vmem:[#allocation3] sm:$0xff] 0.0
        %1088 = vst [vmem:[#allocation3 + $0x8] sm:$0xff] 0.0
        %1089 = vst [vmem:[#allocation4] sm:$0xff] 0.0
        %1090 = vst [vmem:[#allocation4 + $0x8] sm:$0xff] 0.0
      $region44: #{light_conv_bn_act.1} parent=39 // pred_fallthru
        _
      %s1091 = sadd.s32 %s22, 1
      %s1092 = smul.u32 %s1091, 16
      %s1093 = sadd.s32 %s1092, 1
      %p1094 = scmp.gt.s32.totalorder %s1093, 16
      // Predicated region
      $region45: #{light_conv_bn_act.1} parent=39 // pred_check
        %p1095 = pneg %p1094
      $region46: #{light_conv_bn_act.1} parent=39 // pred_check_branch
        %1097 = sbr.rel (%p1095) target = $region48
      $region47: #{light_conv_bn_act.1} parent=39 // pred_region
        %s1098 = smul.u32 %s22, 16
        %v1099 = vstv %s1098
        %v1100 = vadd.s32 %v1099, 17
        %v1101 = vsub.s32 %v1100, 1
        %vm1102 = vcmp.lt.s32.totalorder %v1101, 16
        %s1103 = scalar_lea.vmem [#allocation2], 272
        %v1104 = vld [vmem:[%s1103] sm:$0xff]
        %v1105 = vld [vmem:[%s1103 + $0x8] sm:$0xff]
        %v1106 = vsel %vm1102, 1, 0
        %vm1107 = vcmp.eq.s32.totalorder %v1106, 1
        %v1108 = vsel %vm1107, %v1104, 0.0
        %v1109 = vsel %vm1107, %v1105, 0.0
        %1110 = vst [vmem:[%s1103] sm:$0xff] %v1108
        %1111 = vst [vmem:[%s1103 + $0x8] sm:$0xff] %v1109
        %s1112 = scalar_lea.vmem [#allocation3], 272
        %v1113 = vld [vmem:[%s1112] sm:$0xff]
        %v1114 = vld [vmem:[%s1112 + $0x8] sm:$0xff]
        %v1115 = vsel %vm1107, %v1113, 0.0
        %v1116 = vsel %vm1107, %v1114, 0.0
        %1117 = vst [vmem:[%s1112] sm:$0xff] %v1115
        %1118 = vst [vmem:[%s1112 + $0x8] sm:$0xff] %v1116
        %s1119 = scalar_lea.vmem [#allocation4], 272
        %v1120 = vld [vmem:[%s1119] sm:$0xff]
        %v1121 = vld [vmem:[%s1119 + $0x8] sm:$0xff]
        %v1122 = vsel %vm1107, %v1120, 0.0
        %v1123 = vsel %vm1107, %v1121, 0.0
        %1124 = vst [vmem:[%s1119] sm:$0xff] %v1122
        %1125 = vst [vmem:[%s1119 + $0x8] sm:$0xff] %v1123
      $region48: #{light_conv_bn_act.1} parent=39 // pred_fallthru
        _
      %v1126 = vld [vmem:[%s323] sm:$0xff]
      %v1127 = vld [vmem:[%s323 + $0x8] sm:$0x1]
      %v1128 = vld [vmem:[%s326] sm:$0x1]
      %v1129 = vld [vmem:[#allocation2] sm:$0xff]
      %v1130 = vld [vmem:[#allocation2 + $0x8] sm:$0xff]
      %v1131 = vld [vmem:[#allocation2 + $0x10] sm:$0xff]
      %v1132 = vld [vmem:[#allocation2 + $0x18] sm:$0xff]
      %v1133 = vld [vmem:[#allocation2 + $0x20] sm:$0xff]
      %v1134 = vld [vmem:[#allocation2 + $0x28] sm:$0xff]
      %v1135 = vld [vmem:[#allocation2 + $0x30] sm:$0xff]
      %v1136 = vld [vmem:[#allocation2 + $0x38] sm:$0xff]
      %v1137 = vld [vmem:[#allocation2 + $0x40] sm:$0xff]
      %v1138 = vld [vmem:[#allocation2 + $0x48] sm:$0xff]
      %v1139 = vld [vmem:[#allocation2 + $0x50] sm:$0xff]
      %v1140 = vld [vmem:[#allocation2 + $0x58] sm:$0xff]
      %v1141 = vld [vmem:[#allocation2 + $0x60] sm:$0xff]
      %v1142 = vld [vmem:[#allocation2 + $0x68] sm:$0xff]
      %v1143 = vld [vmem:[#allocation2 + $0x70] sm:$0xff]
      %v1144 = vld [vmem:[#allocation2 + $0x78] sm:$0xff]
      %v1145 = vld [vmem:[#allocation2 + $0x80] sm:$0xff]
      %v1146 = vld [vmem:[#allocation2 + $0x88] sm:$0xff]
      %v1147 = vld [vmem:[#allocation2 + $0x90] sm:$0xff]
      %v1148 = vld [vmem:[#allocation2 + $0x98] sm:$0xff]
      %v1149 = vld [vmem:[#allocation2 + $0xa0] sm:$0xff]
      %v1150 = vld [vmem:[#allocation2 + $0xa8] sm:$0xff]
      %v1151 = vld [vmem:[#allocation2 + $0xb0] sm:$0xff]
      %v1152 = vld [vmem:[#allocation2 + $0xb8] sm:$0xff]
      %v1153 = vld [vmem:[#allocation2 + $0xc0] sm:$0xff]
      %v1154 = vld [vmem:[#allocation2 + $0xc8] sm:$0xff]
      %v1155 = vld [vmem:[#allocation2 + $0xd0] sm:$0xff]
      %v1156 = vld [vmem:[#allocation2 + $0xd8] sm:$0xff]
      %v1157 = vld [vmem:[#allocation2 + $0xe0] sm:$0xff]
      %v1158 = vld [vmem:[#allocation2 + $0xe8] sm:$0xff]
      %v1159 = vld [vmem:[#allocation2 + $0xf0] sm:$0xff]
      %v1160 = vld [vmem:[#allocation2 + $0xf8] sm:$0xff]
      %v1161 = vlaneseq
      %v1162 = vshrl.u32 %v1161, 7
      %v1163 = vsub.s32 0, %v1162
      %v1164 = vrot.slane %v1126, %v1163
      %v1165 = vmul.f32 %v1129, %v1164
      %v1166 = vmul.f32 %v1130, %v1164
      %v1167 = vmul.f32 %v1131, %v1164
      %v1168 = vmul.f32 %v1132, %v1164
      %v1169 = vmul.f32 %v1133, %v1164
      %v1170 = vmul.f32 %v1134, %v1164
      %v1171 = vmul.f32 %v1135, %v1164
      %v1172 = vmul.f32 %v1136, %v1164
      %v1173 = vmul.f32 %v1137, %v1164
      %v1174 = vmul.f32 %v1138, %v1164
      %v1175 = vmul.f32 %v1139, %v1164
      %v1176 = vmul.f32 %v1140, %v1164
      %v1177 = vmul.f32 %v1141, %v1164
      %v1178 = vmul.f32 %v1142, %v1164
      %v1179 = vmul.f32 %v1143, %v1164
      %v1180 = vmul.f32 %v1144, %v1164
      %v1181 = vmul.f32 %v1145, %v1164
      %v1182 = vmul.f32 %v1146, %v1164
      %v1183 = vmul.f32 %v1147, %v1164
      %v1184 = vmul.f32 %v1148, %v1164
      %v1185 = vmul.f32 %v1149, %v1164
      %v1186 = vmul.f32 %v1150, %v1164
      %v1187 = vmul.f32 %v1151, %v1164
      %v1188 = vmul.f32 %v1152, %v1164
      %v1189 = vmul.f32 %v1153, %v1164
      %v1190 = vmul.f32 %v1154, %v1164
      %v1191 = vmul.f32 %v1155, %v1164
      %v1192 = vmul.f32 %v1156, %v1164
      %v1193 = vmul.f32 %v1157, %v1164
      %v1194 = vmul.f32 %v1158, %v1164
      %v1195 = vmul.f32 %v1159, %v1164
      %v1196 = vmul.f32 %v1160, %v1164
      %v1197 = vld [vmem:[#allocation3] sm:$0xff]
      %v1198 = vld [vmem:[#allocation3 + $0x8] sm:$0xff]
      %v1199 = vld [vmem:[#allocation3 + $0x10] sm:$0xff]
      %v1200 = vld [vmem:[#allocation3 + $0x18] sm:$0xff]
      %v1201 = vld [vmem:[#allocation3 + $0x20] sm:$0xff]
      %v1202 = vld [vmem:[#allocation3 + $0x28] sm:$0xff]
      %v1203 = vld [vmem:[#allocation3 + $0x30] sm:$0xff]
      %v1204 = vld [vmem:[#allocation3 + $0x38] sm:$0xff]
      %v1205 = vld [vmem:[#allocation3 + $0x40] sm:$0xff]
      %v1206 = vld [vmem:[#allocation3 + $0x48] sm:$0xff]
      %v1207 = vld [vmem:[#allocation3 + $0x50] sm:$0xff]
      %v1208 = vld [vmem:[#allocation3 + $0x58] sm:$0xff]
      %v1209 = vld [vmem:[#allocation3 + $0x60] sm:$0xff]
      %v1210 = vld [vmem:[#allocation3 + $0x68] sm:$0xff]
      %v1211 = vld [vmem:[#allocation3 + $0x70] sm:$0xff]
      %v1212 = vld [vmem:[#allocation3 + $0x78] sm:$0xff]
      %v1213 = vld [vmem:[#allocation3 + $0x80] sm:$0xff]
      %v1214 = vld [vmem:[#allocation3 + $0x88] sm:$0xff]
      %v1215 = vld [vmem:[#allocation3 + $0x90] sm:$0xff]
      %v1216 = vld [vmem:[#allocation3 + $0x98] sm:$0xff]
      %v1217 = vld [vmem:[#allocation3 + $0xa0] sm:$0xff]
      %v1218 = vld [vmem:[#allocation3 + $0xa8] sm:$0xff]
      %v1219 = vld [vmem:[#allocation3 + $0xb0] sm:$0xff]
      %v1220 = vld [vmem:[#allocation3 + $0xb8] sm:$0xff]
      %v1221 = vld [vmem:[#allocation3 + $0xc0] sm:$0xff]
      %v1222 = vld [vmem:[#allocation3 + $0xc8] sm:$0xff]
      %v1223 = vld [vmem:[#allocation3 + $0xd0] sm:$0xff]
      %v1224 = vld [vmem:[#allocation3 + $0xd8] sm:$0xff]
      %v1225 = vld [vmem:[#allocation3 + $0xe0] sm:$0xff]
      %v1226 = vld [vmem:[#allocation3 + $0xe8] sm:$0xff]
      %v1227 = vld [vmem:[#allocation3 + $0xf0] sm:$0xff]
      %v1228 = vld [vmem:[#allocation3 + $0xf8] sm:$0xff]
      %v1229 = vlaneseq
      %v1230 = vshrl.u32 %v1229, 7
      %v1231 = vsub.s32 1, %v1230
      %v1232 = vrot.slane %v1126, %v1231
      %v1233 = vmul.f32 %v1197, %v1232
      %v1234 = vmul.f32 %v1198, %v1232
      %v1235 = vmul.f32 %v1199, %v1232
      %v1236 = vmul.f32 %v1200, %v1232
      %v1237 = vmul.f32 %v1201, %v1232
      %v1238 = vmul.f32 %v1202, %v1232
      %v1239 = vmul.f32 %v1203, %v1232
      %v1240 = vmul.f32 %v1204, %v1232
      %v1241 = vmul.f32 %v1205, %v1232
      %v1242 = vmul.f32 %v1206, %v1232
      %v1243 = vmul.f32 %v1207, %v1232
      %v1244 = vmul.f32 %v1208, %v1232
      %v1245 = vmul.f32 %v1209, %v1232
      %v1246 = vmul.f32 %v1210, %v1232
      %v1247 = vmul.f32 %v1211, %v1232
      %v1248 = vmul.f32 %v1212, %v1232
      %v1249 = vmul.f32 %v1213, %v1232
      %v1250 = vmul.f32 %v1214, %v1232
      %v1251 = vmul.f32 %v1215, %v1232
      %v1252 = vmul.f32 %v1216, %v1232
      %v1253 = vmul.f32 %v1217, %v1232
      %v1254 = vmul.f32 %v1218, %v1232
      %v1255 = vmul.f32 %v1219, %v1232
      %v1256 = vmul.f32 %v1220, %v1232
      %v1257 = vmul.f32 %v1221, %v1232
      %v1258 = vmul.f32 %v1222, %v1232
      %v1259 = vmul.f32 %v1223, %v1232
      %v1260 = vmul.f32 %v1224, %v1232
      %v1261 = vmul.f32 %v1225, %v1232
      %v1262 = vmul.f32 %v1226, %v1232
      %v1263 = vmul.f32 %v1227, %v1232
      %v1264 = vmul.f32 %v1228, %v1232
      %v1265 = vadd.f32 %v1165, %v1233
      %v1266 = vadd.f32 %v1166, %v1234
      %v1267 = vadd.f32 %v1167, %v1235
      %v1268 = vadd.f32 %v1168, %v1236
      %v1269 = vadd.f32 %v1169, %v1237
      %v1270 = vadd.f32 %v1170, %v1238
      %v1271 = vadd.f32 %v1171, %v1239
      %v1272 = vadd.f32 %v1172, %v1240
      %v1273 = vadd.f32 %v1173, %v1241
      %v1274 = vadd.f32 %v1174, %v1242
      %v1275 = vadd.f32 %v1175, %v1243
      %v1276 = vadd.f32 %v1176, %v1244
      %v1277 = vadd.f32 %v1177, %v1245
      %v1278 = vadd.f32 %v1178, %v1246
      %v1279 = vadd.f32 %v1179, %v1247
      %v1280 = vadd.f32 %v1180, %v1248
      %v1281 = vadd.f32 %v1181, %v1249
      %v1282 = vadd.f32 %v1182, %v1250
      %v1283 = vadd.f32 %v1183, %v1251
      %v1284 = vadd.f32 %v1184, %v1252
      %v1285 = vadd.f32 %v1185, %v1253
      %v1286 = vadd.f32 %v1186, %v1254
      %v1287 = vadd.f32 %v1187, %v1255
      %v1288 = vadd.f32 %v1188, %v1256
      %v1289 = vadd.f32 %v1189, %v1257
      %v1290 = vadd.f32 %v1190, %v1258
      %v1291 = vadd.f32 %v1191, %v1259
      %v1292 = vadd.f32 %v1192, %v1260
      %v1293 = vadd.f32 %v1193, %v1261
      %v1294 = vadd.f32 %v1194, %v1262
      %v1295 = vadd.f32 %v1195, %v1263
      %v1296 = vadd.f32 %v1196, %v1264
      %v1297 = vld [vmem:[#allocation4] sm:$0xff]
      %v1298 = vld [vmem:[#allocation4 + $0x8] sm:$0xff]
      %v1299 = vld [vmem:[#allocation4 + $0x10] sm:$0xff]
      %v1300 = vld [vmem:[#allocation4 + $0x18] sm:$0xff]
      %v1301 = vld [vmem:[#allocation4 + $0x20] sm:$0xff]
      %v1302 = vld [vmem:[#allocation4 + $0x28] sm:$0xff]
      %v1303 = vld [vmem:[#allocation4 + $0x30] sm:$0xff]
      %v1304 = vld [vmem:[#allocation4 + $0x38] sm:$0xff]
      %v1305 = vld [vmem:[#allocation4 + $0x40] sm:$0xff]
      %v1306 = vld [vmem:[#allocation4 + $0x48] sm:$0xff]
      %v1307 = vld [vmem:[#allocation4 + $0x50] sm:$0xff]
      %v1308 = vld [vmem:[#allocation4 + $0x58] sm:$0xff]
      %v1309 = vld [vmem:[#allocation4 + $0x60] sm:$0xff]
      %v1310 = vld [vmem:[#allocation4 + $0x68] sm:$0xff]
      %v1311 = vld [vmem:[#allocation4 + $0x70] sm:$0xff]
      %v1312 = vld [vmem:[#allocation4 + $0x78] sm:$0xff]
      %v1313 = vld [vmem:[#allocation4 + $0x80] sm:$0xff]
      %v1314 = vld [vmem:[#allocation4 + $0x88] sm:$0xff]
      %v1315 = vld [vmem:[#allocation4 + $0x90] sm:$0xff]
      %v1316 = vld [vmem:[#allocation4 + $0x98] sm:$0xff]
      %v1317 = vld [vmem:[#allocation4 + $0xa0] sm:$0xff]
      %v1318 = vld [vmem:[#allocation4 + $0xa8] sm:$0xff]
      %v1319 = vld [vmem:[#allocation4 + $0xb0] sm:$0xff]
      %v1320 = vld [vmem:[#allocation4 + $0xb8] sm:$0xff]
      %v1321 = vld [vmem:[#allocation4 + $0xc0] sm:$0xff]
      %v1322 = vld [vmem:[#allocation4 + $0xc8] sm:$0xff]
      %v1323 = vld [vmem:[#allocation4 + $0xd0] sm:$0xff]
      %v1324 = vld [vmem:[#allocation4 + $0xd8] sm:$0xff]
      %v1325 = vld [vmem:[#allocation4 + $0xe0] sm:$0xff]
      %v1326 = vld [vmem:[#allocation4 + $0xe8] sm:$0xff]
      %v1327 = vld [vmem:[#allocation4 + $0xf0] sm:$0xff]
      %v1328 = vld [vmem:[#allocation4 + $0xf8] sm:$0xff]
      %v1329 = vlaneseq
      %v1330 = vshrl.u32 %v1329, 7
      %v1331 = vsub.s32 2, %v1330
      %v1332 = vrot.slane %v1126, %v1331
      %v1333 = vmul.f32 %v1297, %v1332
      %v1334 = vmul.f32 %v1298, %v1332
      %v1335 = vmul.f32 %v1299, %v1332
      %v1336 = vmul.f32 %v1300, %v1332
      %v1337 = vmul.f32 %v1301, %v1332
      %v1338 = vmul.f32 %v1302, %v1332
      %v1339 = vmul.f32 %v1303, %v1332
      %v1340 = vmul.f32 %v1304, %v1332
      %v1341 = vmul.f32 %v1305, %v1332
      %v1342 = vmul.f32 %v1306, %v1332
      %v1343 = vmul.f32 %v1307, %v1332
      %v1344 = vmul.f32 %v1308, %v1332
      %v1345 = vmul.f32 %v1309, %v1332
      %v1346 = vmul.f32 %v1310, %v1332
      %v1347 = vmul.f32 %v1311, %v1332
      %v1348 = vmul.f32 %v1312, %v1332
      %v1349 = vmul.f32 %v1313, %v1332
      %v1350 = vmul.f32 %v1314, %v1332
      %v1351 = vmul.f32 %v1315, %v1332
      %v1352 = vmul.f32 %v1316, %v1332
      %v1353 = vmul.f32 %v1317, %v1332
      %v1354 = vmul.f32 %v1318, %v1332
      %v1355 = vmul.f32 %v1319, %v1332
      %v1356 = vmul.f32 %v1320, %v1332
      %v1357 = vmul.f32 %v1321, %v1332
      %v1358 = vmul.f32 %v1322, %v1332
      %v1359 = vmul.f32 %v1323, %v1332
      %v1360 = vmul.f32 %v1324, %v1332
      %v1361 = vmul.f32 %v1325, %v1332
      %v1362 = vmul.f32 %v1326, %v1332
      %v1363 = vmul.f32 %v1327, %v1332
      %v1364 = vmul.f32 %v1328, %v1332
      %v1365 = vadd.f32 %v1265, %v1333
      %v1366 = vadd.f32 %v1266, %v1334
      %v1367 = vadd.f32 %v1267, %v1335
      %v1368 = vadd.f32 %v1268, %v1336
      %v1369 = vadd.f32 %v1269, %v1337
      %v1370 = vadd.f32 %v1270, %v1338
      %v1371 = vadd.f32 %v1271, %v1339
      %v1372 = vadd.f32 %v1272, %v1340
      %v1373 = vadd.f32 %v1273, %v1341
      %v1374 = vadd.f32 %v1274, %v1342
      %v1375 = vadd.f32 %v1275, %v1343
      %v1376 = vadd.f32 %v1276, %v1344
      %v1377 = vadd.f32 %v1277, %v1345
      %v1378 = vadd.f32 %v1278, %v1346
      %v1379 = vadd.f32 %v1279, %v1347
      %v1380 = vadd.f32 %v1280, %v1348
      %v1381 = vadd.f32 %v1281, %v1349
      %v1382 = vadd.f32 %v1282, %v1350
      %v1383 = vadd.f32 %v1283, %v1351
      %v1384 = vadd.f32 %v1284, %v1352
      %v1385 = vadd.f32 %v1285, %v1353
      %v1386 = vadd.f32 %v1286, %v1354
      %v1387 = vadd.f32 %v1287, %v1355
      %v1388 = vadd.f32 %v1288, %v1356
      %v1389 = vadd.f32 %v1289, %v1357
      %v1390 = vadd.f32 %v1290, %v1358
      %v1391 = vadd.f32 %v1291, %v1359
      %v1392 = vadd.f32 %v1292, %v1360
      %v1393 = vadd.f32 %v1293, %v1361
      %v1394 = vadd.f32 %v1294, %v1362
      %v1395 = vadd.f32 %v1295, %v1363
      %v1396 = vadd.f32 %v1296, %v1364
      %s1397 = scalar_lea.vmem [#allocation2], 16
      %v1398 = vld [vmem:[%s1397] sm:$0xff]
      %v1399 = vld [vmem:[%s1397 + $0x8] sm:$0xff]
      %v1400 = vld [vmem:[%s1397 + $0x10] sm:$0xff]
      %v1401 = vld [vmem:[%s1397 + $0x18] sm:$0xff]
      %v1402 = vld [vmem:[%s1397 + $0x20] sm:$0xff]
      %v1403 = vld [vmem:[%s1397 + $0x28] sm:$0xff]
      %v1404 = vld [vmem:[%s1397 + $0x30] sm:$0xff]
      %v1405 = vld [vmem:[%s1397 + $0x38] sm:$0xff]
      %v1406 = vld [vmem:[%s1397 + $0x40] sm:$0xff]
      %v1407 = vld [vmem:[%s1397 + $0x48] sm:$0xff]
      %v1408 = vld [vmem:[%s1397 + $0x50] sm:$0xff]
      %v1409 = vld [vmem:[%s1397 + $0x58] sm:$0xff]
      %v1410 = vld [vmem:[%s1397 + $0x60] sm:$0xff]
      %v1411 = vld [vmem:[%s1397 + $0x68] sm:$0xff]
      %v1412 = vld [vmem:[%s1397 + $0x70] sm:$0xff]
      %v1413 = vld [vmem:[%s1397 + $0x78] sm:$0xff]
      %v1414 = vld [vmem:[%s1397 + $0x80] sm:$0xff]
      %v1415 = vld [vmem:[%s1397 + $0x88] sm:$0xff]
      %v1416 = vld [vmem:[%s1397 + $0x90] sm:$0xff]
      %v1417 = vld [vmem:[%s1397 + $0x98] sm:$0xff]
      %v1418 = vld [vmem:[%s1397 + $0xa0] sm:$0xff]
      %v1419 = vld [vmem:[%s1397 + $0xa8] sm:$0xff]
      %v1420 = vld [vmem:[%s1397 + $0xb0] sm:$0xff]
      %v1421 = vld [vmem:[%s1397 + $0xb8] sm:$0xff]
      %v1422 = vld [vmem:[%s1397 + $0xc0] sm:$0xff]
      %v1423 = vld [vmem:[%s1397 + $0xc8] sm:$0xff]
      %v1424 = vld [vmem:[%s1397 + $0xd0] sm:$0xff]
      %v1425 = vld [vmem:[%s1397 + $0xd8] sm:$0xff]
      %v1426 = vld [vmem:[%s1397 + $0xe0] sm:$0xff]
      %v1427 = vld [vmem:[%s1397 + $0xe8] sm:$0xff]
      %v1428 = vld [vmem:[%s1397 + $0xf0] sm:$0xff]
      %v1429 = vld [vmem:[%s1397 + $0xf8] sm:$0xff]
      %v1430 = vlaneseq
      %v1431 = vshrl.u32 %v1430, 7
      %v1432 = vsub.s32 3, %v1431
      %v1433 = vrot.slane %v1126, %v1432
      %v1434 = vmul.f32 %v1398, %v1433
      %v1435 = vmul.f32 %v1399, %v1433
      %v1436 = vmul.f32 %v1400, %v1433
      %v1437 = vmul.f32 %v1401, %v1433
      %v1438 = vmul.f32 %v1402, %v1433
      %v1439 = vmul.f32 %v1403, %v1433
      %v1440 = vmul.f32 %v1404, %v1433
      %v1441 = vmul.f32 %v1405, %v1433
      %v1442 = vmul.f32 %v1406, %v1433
      %v1443 = vmul.f32 %v1407, %v1433
      %v1444 = vmul.f32 %v1408, %v1433
      %v1445 = vmul.f32 %v1409, %v1433
      %v1446 = vmul.f32 %v1410, %v1433
      %v1447 = vmul.f32 %v1411, %v1433
      %v1448 = vmul.f32 %v1412, %v1433
      %v1449 = vmul.f32 %v1413, %v1433
      %v1450 = vmul.f32 %v1414, %v1433
      %v1451 = vmul.f32 %v1415, %v1433
      %v1452 = vmul.f32 %v1416, %v1433
      %v1453 = vmul.f32 %v1417, %v1433
      %v1454 = vmul.f32 %v1418, %v1433
      %v1455 = vmul.f32 %v1419, %v1433
      %v1456 = vmul.f32 %v1420, %v1433
      %v1457 = vmul.f32 %v1421, %v1433
      %v1458 = vmul.f32 %v1422, %v1433
      %v1459 = vmul.f32 %v1423, %v1433
      %v1460 = vmul.f32 %v1424, %v1433
      %v1461 = vmul.f32 %v1425, %v1433
      %v1462 = vmul.f32 %v1426, %v1433
      %v1463 = vmul.f32 %v1427, %v1433
      %v1464 = vmul.f32 %v1428, %v1433
      %v1465 = vmul.f32 %v1429, %v1433
      %v1466 = vadd.f32 %v1365, %v1434
      %v1467 = vadd.f32 %v1366, %v1435
      %v1468 = vadd.f32 %v1367, %v1436
      %v1469 = vadd.f32 %v1368, %v1437
      %v1470 = vadd.f32 %v1369, %v1438
      %v1471 = vadd.f32 %v1370, %v1439
      %v1472 = vadd.f32 %v1371, %v1440
      %v1473 = vadd.f32 %v1372, %v1441
      %v1474 = vadd.f32 %v1373, %v1442
      %v1475 = vadd.f32 %v1374, %v1443
      %v1476 = vadd.f32 %v1375, %v1444
      %v1477 = vadd.f32 %v1376, %v1445
      %v1478 = vadd.f32 %v1377, %v1446
      %v1479 = vadd.f32 %v1378, %v1447
      %v1480 = vadd.f32 %v1379, %v1448
      %v1481 = vadd.f32 %v1380, %v1449
      %v1482 = vadd.f32 %v1381, %v1450
      %v1483 = vadd.f32 %v1382, %v1451
      %v1484 = vadd.f32 %v1383, %v1452
      %v1485 = vadd.f32 %v1384, %v1453
      %v1486 = vadd.f32 %v1385, %v1454
      %v1487 = vadd.f32 %v1386, %v1455
      %v1488 = vadd.f32 %v1387, %v1456
      %v1489 = vadd.f32 %v1388, %v1457
      %v1490 = vadd.f32 %v1389, %v1458
      %v1491 = vadd.f32 %v1390, %v1459
      %v1492 = vadd.f32 %v1391, %v1460
      %v1493 = vadd.f32 %v1392, %v1461
      %v1494 = vadd.f32 %v1393, %v1462
      %v1495 = vadd.f32 %v1394, %v1463
      %v1496 = vadd.f32 %v1395, %v1464
      %v1497 = vadd.f32 %v1396, %v1465
      %s1498 = scalar_lea.vmem [#allocation3], 16
      %v1499 = vld [vmem:[%s1498] sm:$0xff]
      %v1500 = vld [vmem:[%s1498 + $0x8] sm:$0xff]
      %v1501 = vld [vmem:[%s1498 + $0x10] sm:$0xff]
      %v1502 = vld [vmem:[%s1498 + $0x18] sm:$0xff]
      %v1503 = vld [vmem:[%s1498 + $0x20] sm:$0xff]
      %v1504 = vld [vmem:[%s1498 + $0x28] sm:$0xff]
      %v1505 = vld [vmem:[%s1498 + $0x30] sm:$0xff]
      %v1506 = vld [vmem:[%s1498 + $0x38] sm:$0xff]
      %v1507 = vld [vmem:[%s1498 + $0x40] sm:$0xff]
      %v1508 = vld [vmem:[%s1498 + $0x48] sm:$0xff]
      %v1509 = vld [vmem:[%s1498 + $0x50] sm:$0xff]
      %v1510 = vld [vmem:[%s1498 + $0x58] sm:$0xff]
      %v1511 = vld [vmem:[%s1498 + $0x60] sm:$0xff]
      %v1512 = vld [vmem:[%s1498 + $0x68] sm:$0xff]
      %v1513 = vld [vmem:[%s1498 + $0x70] sm:$0xff]
      %v1514 = vld [vmem:[%s1498 + $0x78] sm:$0xff]
      %v1515 = vld [vmem:[%s1498 + $0x80] sm:$0xff]
      %v1516 = vld [vmem:[%s1498 + $0x88] sm:$0xff]
      %v1517 = vld [vmem:[%s1498 + $0x90] sm:$0xff]
      %v1518 = vld [vmem:[%s1498 + $0x98] sm:$0xff]
      %v1519 = vld [vmem:[%s1498 + $0xa0] sm:$0xff]
      %v1520 = vld [vmem:[%s1498 + $0xa8] sm:$0xff]
      %v1521 = vld [vmem:[%s1498 + $0xb0] sm:$0xff]
      %v1522 = vld [vmem:[%s1498 + $0xb8] sm:$0xff]
      %v1523 = vld [vmem:[%s1498 + $0xc0] sm:$0xff]
      %v1524 = vld [vmem:[%s1498 + $0xc8] sm:$0xff]
      %v1525 = vld [vmem:[%s1498 + $0xd0] sm:$0xff]
      %v1526 = vld [vmem:[%s1498 + $0xd8] sm:$0xff]
      %v1527 = vld [vmem:[%s1498 + $0xe0] sm:$0xff]
      %v1528 = vld [vmem:[%s1498 + $0xe8] sm:$0xff]
      %v1529 = vld [vmem:[%s1498 + $0xf0] sm:$0xff]
      %v1530 = vld [vmem:[%s1498 + $0xf8] sm:$0xff]
      %v1531 = vlaneseq
      %v1532 = vshrl.u32 %v1531, 7
      %v1533 = vsub.s32 4, %v1532
      %v1534 = vrot.slane %v1126, %v1533
      %v1535 = vmul.f32 %v1499, %v1534
      %v1536 = vmul.f32 %v1500, %v1534
      %v1537 = vmul.f32 %v1501, %v1534
      %v1538 = vmul.f32 %v1502, %v1534
      %v1539 = vmul.f32 %v1503, %v1534
      %v1540 = vmul.f32 %v1504, %v1534
      %v1541 = vmul.f32 %v1505, %v1534
      %v1542 = vmul.f32 %v1506, %v1534
      %v1543 = vmul.f32 %v1507, %v1534
      %v1544 = vmul.f32 %v1508, %v1534
      %v1545 = vmul.f32 %v1509, %v1534
      %v1546 = vmul.f32 %v1510, %v1534
      %v1547 = vmul.f32 %v1511, %v1534
      %v1548 = vmul.f32 %v1512, %v1534
      %v1549 = vmul.f32 %v1513, %v1534
      %v1550 = vmul.f32 %v1514, %v1534
      %v1551 = vmul.f32 %v1515, %v1534
      %v1552 = vmul.f32 %v1516, %v1534
      %v1553 = vmul.f32 %v1517, %v1534
      %v1554 = vmul.f32 %v1518, %v1534
      %v1555 = vmul.f32 %v1519, %v1534
      %v1556 = vmul.f32 %v1520, %v1534
      %v1557 = vmul.f32 %v1521, %v1534
      %v1558 = vmul.f32 %v1522, %v1534
      %v1559 = vmul.f32 %v1523, %v1534
      %v1560 = vmul.f32 %v1524, %v1534
      %v1561 = vmul.f32 %v1525, %v1534
      %v1562 = vmul.f32 %v1526, %v1534
      %v1563 = vmul.f32 %v1527, %v1534
      %v1564 = vmul.f32 %v1528, %v1534
      %v1565 = vmul.f32 %v1529, %v1534
      %v1566 = vmul.f32 %v1530, %v1534
      %v1567 = vadd.f32 %v1466, %v1535
      %v1568 = vadd.f32 %v1467, %v1536
      %v1569 = vadd.f32 %v1468, %v1537
      %v1570 = vadd.f32 %v1469, %v1538
      %v1571 = vadd.f32 %v1470, %v1539
      %v1572 = vadd.f32 %v1471, %v1540
      %v1573 = vadd.f32 %v1472, %v1541
      %v1574 = vadd.f32 %v1473, %v1542
      %v1575 = vadd.f32 %v1474, %v1543
      %v1576 = vadd.f32 %v1475, %v1544
      %v1577 = vadd.f32 %v1476, %v1545
      %v1578 = vadd.f32 %v1477, %v1546
      %v1579 = vadd.f32 %v1478, %v1547
      %v1580 = vadd.f32 %v1479, %v1548
      %v1581 = vadd.f32 %v1480, %v1549
      %v1582 = vadd.f32 %v1481, %v1550
      %v1583 = vadd.f32 %v1482, %v1551
      %v1584 = vadd.f32 %v1483, %v1552
      %v1585 = vadd.f32 %v1484, %v1553
      %v1586 = vadd.f32 %v1485, %v1554
      %v1587 = vadd.f32 %v1486, %v1555
      %v1588 = vadd.f32 %v1487, %v1556
      %v1589 = vadd.f32 %v1488, %v1557
      %v1590 = vadd.f32 %v1489, %v1558
      %v1591 = vadd.f32 %v1490, %v1559
      %v1592 = vadd.f32 %v1491, %v1560
      %v1593 = vadd.f32 %v1492, %v1561
      %v1594 = vadd.f32 %v1493, %v1562
      %v1595 = vadd.f32 %v1494, %v1563
      %v1596 = vadd.f32 %v1495, %v1564
      %v1597 = vadd.f32 %v1496, %v1565
      %v1598 = vadd.f32 %v1497, %v1566
      %s1599 = scalar_lea.vmem [#allocation4], 16
      %v1600 = vld [vmem:[%s1599] sm:$0xff]
      %v1601 = vld [vmem:[%s1599 + $0x8] sm:$0xff]
      %v1602 = vld [vmem:[%s1599 + $0x10] sm:$0xff]
      %v1603 = vld [vmem:[%s1599 + $0x18] sm:$0xff]
      %v1604 = vld [vmem:[%s1599 + $0x20] sm:$0xff]
      %v1605 = vld [vmem:[%s1599 + $0x28] sm:$0xff]
      %v1606 = vld [vmem:[%s1599 + $0x30] sm:$0xff]
      %v1607 = vld [vmem:[%s1599 + $0x38] sm:$0xff]
      %v1608 = vld [vmem:[%s1599 + $0x40] sm:$0xff]
      %v1609 = vld [vmem:[%s1599 + $0x48] sm:$0xff]
      %v1610 = vld [vmem:[%s1599 + $0x50] sm:$0xff]
      %v1611 = vld [vmem:[%s1599 + $0x58] sm:$0xff]
      %v1612 = vld [vmem:[%s1599 + $0x60] sm:$0xff]
      %v1613 = vld [vmem:[%s1599 + $0x68] sm:$0xff]
      %v1614 = vld [vmem:[%s1599 + $0x70] sm:$0xff]
      %v1615 = vld [vmem:[%s1599 + $0x78] sm:$0xff]
      %v1616 = vld [vmem:[%s1599 + $0x80] sm:$0xff]
      %v1617 = vld [vmem:[%s1599 + $0x88] sm:$0xff]
      %v1618 = vld [vmem:[%s1599 + $0x90] sm:$0xff]
      %v1619 = vld [vmem:[%s1599 + $0x98] sm:$0xff]
      %v1620 = vld [vmem:[%s1599 + $0xa0] sm:$0xff]
      %v1621 = vld [vmem:[%s1599 + $0xa8] sm:$0xff]
      %v1622 = vld [vmem:[%s1599 + $0xb0] sm:$0xff]
      %v1623 = vld [vmem:[%s1599 + $0xb8] sm:$0xff]
      %v1624 = vld [vmem:[%s1599 + $0xc0] sm:$0xff]
      %v1625 = vld [vmem:[%s1599 + $0xc8] sm:$0xff]
      %v1626 = vld [vmem:[%s1599 + $0xd0] sm:$0xff]
      %v1627 = vld [vmem:[%s1599 + $0xd8] sm:$0xff]
      %v1628 = vld [vmem:[%s1599 + $0xe0] sm:$0xff]
      %v1629 = vld [vmem:[%s1599 + $0xe8] sm:$0xff]
      %v1630 = vld [vmem:[%s1599 + $0xf0] sm:$0xff]
      %v1631 = vld [vmem:[%s1599 + $0xf8] sm:$0xff]
      %v1632 = vlaneseq
      %v1633 = vshrl.u32 %v1632, 7
      %v1634 = vsub.s32 5, %v1633
      %v1635 = vrot.slane %v1126, %v1634
      %v1636 = vmul.f32 %v1600, %v1635
      %v1637 = vmul.f32 %v1601, %v1635
      %v1638 = vmul.f32 %v1602, %v1635
      %v1639 = vmul.f32 %v1603, %v1635
      %v1640 = vmul.f32 %v1604, %v1635
      %v1641 = vmul.f32 %v1605, %v1635
      %v1642 = vmul.f32 %v1606, %v1635
      %v1643 = vmul.f32 %v1607, %v1635
      %v1644 = vmul.f32 %v1608, %v1635
      %v1645 = vmul.f32 %v1609, %v1635
      %v1646 = vmul.f32 %v1610, %v1635
      %v1647 = vmul.f32 %v1611, %v1635
      %v1648 = vmul.f32 %v1612, %v1635
      %v1649 = vmul.f32 %v1613, %v1635
      %v1650 = vmul.f32 %v1614, %v1635
      %v1651 = vmul.f32 %v1615, %v1635
      %v1652 = vmul.f32 %v1616, %v1635
      %v1653 = vmul.f32 %v1617, %v1635
      %v1654 = vmul.f32 %v1618, %v1635
      %v1655 = vmul.f32 %v1619, %v1635
      %v1656 = vmul.f32 %v1620, %v1635
      %v1657 = vmul.f32 %v1621, %v1635
      %v1658 = vmul.f32 %v1622, %v1635
      %v1659 = vmul.f32 %v1623, %v1635
      %v1660 = vmul.f32 %v1624, %v1635
      %v1661 = vmul.f32 %v1625, %v1635
      %v1662 = vmul.f32 %v1626, %v1635
      %v1663 = vmul.f32 %v1627, %v1635
      %v1664 = vmul.f32 %v1628, %v1635
      %v1665 = vmul.f32 %v1629, %v1635
      %v1666 = vmul.f32 %v1630, %v1635
      %v1667 = vmul.f32 %v1631, %v1635
      %v1668 = vadd.f32 %v1567, %v1636
      %v1669 = vadd.f32 %v1568, %v1637
      %v1670 = vadd.f32 %v1569, %v1638
      %v1671 = vadd.f32 %v1570, %v1639
      %v1672 = vadd.f32 %v1571, %v1640
      %v1673 = vadd.f32 %v1572, %v1641
      %v1674 = vadd.f32 %v1573, %v1642
      %v1675 = vadd.f32 %v1574, %v1643
      %v1676 = vadd.f32 %v1575, %v1644
      %v1677 = vadd.f32 %v1576, %v1645
      %v1678 = vadd.f32 %v1577, %v1646
      %v1679 = vadd.f32 %v1578, %v1647
      %v1680 = vadd.f32 %v1579, %v1648
      %v1681 = vadd.f32 %v1580, %v1649
      %v1682 = vadd.f32 %v1581, %v1650
      %v1683 = vadd.f32 %v1582, %v1651
      %v1684 = vadd.f32 %v1583, %v1652
      %v1685 = vadd.f32 %v1584, %v1653
      %v1686 = vadd.f32 %v1585, %v1654
      %v1687 = vadd.f32 %v1586, %v1655
      %v1688 = vadd.f32 %v1587, %v1656
      %v1689 = vadd.f32 %v1588, %v1657
      %v1690 = vadd.f32 %v1589, %v1658
      %v1691 = vadd.f32 %v1590, %v1659
      %v1692 = vadd.f32 %v1591, %v1660
      %v1693 = vadd.f32 %v1592, %v1661
      %v1694 = vadd.f32 %v1593, %v1662
      %v1695 = vadd.f32 %v1594, %v1663
      %v1696 = vadd.f32 %v1595, %v1664
      %v1697 = vadd.f32 %v1596, %v1665
      %v1698 = vadd.f32 %v1597, %v1666
      %v1699 = vadd.f32 %v1598, %v1667
      %s1700 = scalar_lea.vmem [#allocation2], 32
      %v1701 = vld [vmem:[%s1700] sm:$0xff]
      %v1702 = vld [vmem:[%s1700 + $0x8] sm:$0xff]
      %v1703 = vld [vmem:[%s1700 + $0x10] sm:$0xff]
      %v1704 = vld [vmem:[%s1700 + $0x18] sm:$0xff]
      %v1705 = vld [vmem:[%s1700 + $0x20] sm:$0xff]
      %v1706 = vld [vmem:[%s1700 + $0x28] sm:$0xff]
      %v1707 = vld [vmem:[%s1700 + $0x30] sm:$0xff]
      %v1708 = vld [vmem:[%s1700 + $0x38] sm:$0xff]
      %v1709 = vld [vmem:[%s1700 + $0x40] sm:$0xff]
      %v1710 = vld [vmem:[%s1700 + $0x48] sm:$0xff]
      %v1711 = vld [vmem:[%s1700 + $0x50] sm:$0xff]
      %v1712 = vld [vmem:[%s1700 + $0x58] sm:$0xff]
      %v1713 = vld [vmem:[%s1700 + $0x60] sm:$0xff]
      %v1714 = vld [vmem:[%s1700 + $0x68] sm:$0xff]
      %v1715 = vld [vmem:[%s1700 + $0x70] sm:$0xff]
      %v1716 = vld [vmem:[%s1700 + $0x78] sm:$0xff]
      %v1717 = vld [vmem:[%s1700 + $0x80] sm:$0xff]
      %v1718 = vld [vmem:[%s1700 + $0x88] sm:$0xff]
      %v1719 = vld [vmem:[%s1700 + $0x90] sm:$0xff]
      %v1720 = vld [vmem:[%s1700 + $0x98] sm:$0xff]
      %v1721 = vld [vmem:[%s1700 + $0xa0] sm:$0xff]
      %v1722 = vld [vmem:[%s1700 + $0xa8] sm:$0xff]
      %v1723 = vld [vmem:[%s1700 + $0xb0] sm:$0xff]
      %v1724 = vld [vmem:[%s1700 + $0xb8] sm:$0xff]
      %v1725 = vld [vmem:[%s1700 + $0xc0] sm:$0xff]
      %v1726 = vld [vmem:[%s1700 + $0xc8] sm:$0xff]
      %v1727 = vld [vmem:[%s1700 + $0xd0] sm:$0xff]
      %v1728 = vld [vmem:[%s1700 + $0xd8] sm:$0xff]
      %v1729 = vld [vmem:[%s1700 + $0xe0] sm:$0xff]
      %v1730 = vld [vmem:[%s1700 + $0xe8] sm:$0xff]
      %v1731 = vld [vmem:[%s1700 + $0xf0] sm:$0xff]
      %v1732 = vld [vmem:[%s1700 + $0xf8] sm:$0xff]
      %v1733 = vlaneseq
      %v1734 = vshrl.u32 %v1733, 7
      %v1735 = vsub.s32 6, %v1734
      %v1736 = vrot.slane %v1126, %v1735
      %v1737 = vmul.f32 %v1701, %v1736
      %v1738 = vmul.f32 %v1702, %v1736
      %v1739 = vmul.f32 %v1703, %v1736
      %v1740 = vmul.f32 %v1704, %v1736
      %v1741 = vmul.f32 %v1705, %v1736
      %v1742 = vmul.f32 %v1706, %v1736
      %v1743 = vmul.f32 %v1707, %v1736
      %v1744 = vmul.f32 %v1708, %v1736
      %v1745 = vmul.f32 %v1709, %v1736
      %v1746 = vmul.f32 %v1710, %v1736
      %v1747 = vmul.f32 %v1711, %v1736
      %v1748 = vmul.f32 %v1712, %v1736
      %v1749 = vmul.f32 %v1713, %v1736
      %v1750 = vmul.f32 %v1714, %v1736
      %v1751 = vmul.f32 %v1715, %v1736
      %v1752 = vmul.f32 %v1716, %v1736
      %v1753 = vmul.f32 %v1717, %v1736
      %v1754 = vmul.f32 %v1718, %v1736
      %v1755 = vmul.f32 %v1719, %v1736
      %v1756 = vmul.f32 %v1720, %v1736
      %v1757 = vmul.f32 %v1721, %v1736
      %v1758 = vmul.f32 %v1722, %v1736
      %v1759 = vmul.f32 %v1723, %v1736
      %v1760 = vmul.f32 %v1724, %v1736
      %v1761 = vmul.f32 %v1725, %v1736
      %v1762 = vmul.f32 %v1726, %v1736
      %v1763 = vmul.f32 %v1727, %v1736
      %v1764 = vmul.f32 %v1728, %v1736
      %v1765 = vmul.f32 %v1729, %v1736
      %v1766 = vmul.f32 %v1730, %v1736
      %v1767 = vmul.f32 %v1731, %v1736
      %v1768 = vmul.f32 %v1732, %v1736
      %v1769 = vadd.f32 %v1668, %v1737
      %v1770 = vadd.f32 %v1669, %v1738
      %v1771 = vadd.f32 %v1670, %v1739
      %v1772 = vadd.f32 %v1671, %v1740
      %v1773 = vadd.f32 %v1672, %v1741
      %v1774 = vadd.f32 %v1673, %v1742
      %v1775 = vadd.f32 %v1674, %v1743
      %v1776 = vadd.f32 %v1675, %v1744
      %v1777 = vadd.f32 %v1676, %v1745
      %v1778 = vadd.f32 %v1677, %v1746
      %v1779 = vadd.f32 %v1678, %v1747
      %v1780 = vadd.f32 %v1679, %v1748
      %v1781 = vadd.f32 %v1680, %v1749
      %v1782 = vadd.f32 %v1681, %v1750
      %v1783 = vadd.f32 %v1682, %v1751
      %v1784 = vadd.f32 %v1683, %v1752
      %v1785 = vadd.f32 %v1684, %v1753
      %v1786 = vadd.f32 %v1685, %v1754
      %v1787 = vadd.f32 %v1686, %v1755
      %v1788 = vadd.f32 %v1687, %v1756
      %v1789 = vadd.f32 %v1688, %v1757
      %v1790 = vadd.f32 %v1689, %v1758
      %v1791 = vadd.f32 %v1690, %v1759
      %v1792 = vadd.f32 %v1691, %v1760
      %v1793 = vadd.f32 %v1692, %v1761
      %v1794 = vadd.f32 %v1693, %v1762
      %v1795 = vadd.f32 %v1694, %v1763
      %v1796 = vadd.f32 %v1695, %v1764
      %v1797 = vadd.f32 %v1696, %v1765
      %v1798 = vadd.f32 %v1697, %v1766
      %v1799 = vadd.f32 %v1698, %v1767
      %v1800 = vadd.f32 %v1699, %v1768
      %s1801 = scalar_lea.vmem [#allocation3], 32
      %v1802 = vld [vmem:[%s1801] sm:$0xff]
      %v1803 = vld [vmem:[%s1801 + $0x8] sm:$0xff]
      %v1804 = vld [vmem:[%s1801 + $0x10] sm:$0xff]
      %v1805 = vld [vmem:[%s1801 + $0x18] sm:$0xff]
      %v1806 = vld [vmem:[%s1801 + $0x20] sm:$0xff]
      %v1807 = vld [vmem:[%s1801 + $0x28] sm:$0xff]
      %v1808 = vld [vmem:[%s1801 + $0x30] sm:$0xff]
      %v1809 = vld [vmem:[%s1801 + $0x38] sm:$0xff]
      %v1810 = vld [vmem:[%s1801 + $0x40] sm:$0xff]
      %v1811 = vld [vmem:[%s1801 + $0x48] sm:$0xff]
      %v1812 = vld [vmem:[%s1801 + $0x50] sm:$0xff]
      %v1813 = vld [vmem:[%s1801 + $0x58] sm:$0xff]
      %v1814 = vld [vmem:[%s1801 + $0x60] sm:$0xff]
      %v1815 = vld [vmem:[%s1801 + $0x68] sm:$0xff]
      %v1816 = vld [vmem:[%s1801 + $0x70] sm:$0xff]
      %v1817 = vld [vmem:[%s1801 + $0x78] sm:$0xff]
      %v1818 = vld [vmem:[%s1801 + $0x80] sm:$0xff]
      %v1819 = vld [vmem:[%s1801 + $0x88] sm:$0xff]
      %v1820 = vld [vmem:[%s1801 + $0x90] sm:$0xff]
      %v1821 = vld [vmem:[%s1801 + $0x98] sm:$0xff]
      %v1822 = vld [vmem:[%s1801 + $0xa0] sm:$0xff]
      %v1823 = vld [vmem:[%s1801 + $0xa8] sm:$0xff]
      %v1824 = vld [vmem:[%s1801 + $0xb0] sm:$0xff]
      %v1825 = vld [vmem:[%s1801 + $0xb8] sm:$0xff]
      %v1826 = vld [vmem:[%s1801 + $0xc0] sm:$0xff]
      %v1827 = vld [vmem:[%s1801 + $0xc8] sm:$0xff]
      %v1828 = vld [vmem:[%s1801 + $0xd0] sm:$0xff]
      %v1829 = vld [vmem:[%s1801 + $0xd8] sm:$0xff]
      %v1830 = vld [vmem:[%s1801 + $0xe0] sm:$0xff]
      %v1831 = vld [vmem:[%s1801 + $0xe8] sm:$0xff]
      %v1832 = vld [vmem:[%s1801 + $0xf0] sm:$0xff]
      %v1833 = vld [vmem:[%s1801 + $0xf8] sm:$0xff]
      %v1834 = vlaneseq
      %v1835 = vshrl.u32 %v1834, 7
      %v1836 = vsub.s32 7, %v1835
      %v1837 = vrot.slane %v1126, %v1836
      %v1838 = vmul.f32 %v1802, %v1837
      %v1839 = vmul.f32 %v1803, %v1837
      %v1840 = vmul.f32 %v1804, %v1837
      %v1841 = vmul.f32 %v1805, %v1837
      %v1842 = vmul.f32 %v1806, %v1837
      %v1843 = vmul.f32 %v1807, %v1837
      %v1844 = vmul.f32 %v1808, %v1837
      %v1845 = vmul.f32 %v1809, %v1837
      %v1846 = vmul.f32 %v1810, %v1837
      %v1847 = vmul.f32 %v1811, %v1837
      %v1848 = vmul.f32 %v1812, %v1837
      %v1849 = vmul.f32 %v1813, %v1837
      %v1850 = vmul.f32 %v1814, %v1837
      %v1851 = vmul.f32 %v1815, %v1837
      %v1852 = vmul.f32 %v1816, %v1837
      %v1853 = vmul.f32 %v1817, %v1837
      %v1854 = vmul.f32 %v1818, %v1837
      %v1855 = vmul.f32 %v1819, %v1837
      %v1856 = vmul.f32 %v1820, %v1837
      %v1857 = vmul.f32 %v1821, %v1837
      %v1858 = vmul.f32 %v1822, %v1837
      %v1859 = vmul.f32 %v1823, %v1837
      %v1860 = vmul.f32 %v1824, %v1837
      %v1861 = vmul.f32 %v1825, %v1837
      %v1862 = vmul.f32 %v1826, %v1837
      %v1863 = vmul.f32 %v1827, %v1837
      %v1864 = vmul.f32 %v1828, %v1837
      %v1865 = vmul.f32 %v1829, %v1837
      %v1866 = vmul.f32 %v1830, %v1837
      %v1867 = vmul.f32 %v1831, %v1837
      %v1868 = vmul.f32 %v1832, %v1837
      %v1869 = vmul.f32 %v1833, %v1837
      %v1870 = vadd.f32 %v1769, %v1838
      %v1871 = vadd.f32 %v1770, %v1839
      %v1872 = vadd.f32 %v1771, %v1840
      %v1873 = vadd.f32 %v1772, %v1841
      %v1874 = vadd.f32 %v1773, %v1842
      %v1875 = vadd.f32 %v1774, %v1843
      %v1876 = vadd.f32 %v1775, %v1844
      %v1877 = vadd.f32 %v1776, %v1845
      %v1878 = vadd.f32 %v1777, %v1846
      %v1879 = vadd.f32 %v1778, %v1847
      %v1880 = vadd.f32 %v1779, %v1848
      %v1881 = vadd.f32 %v1780, %v1849
      %v1882 = vadd.f32 %v1781, %v1850
      %v1883 = vadd.f32 %v1782, %v1851
      %v1884 = vadd.f32 %v1783, %v1852
      %v1885 = vadd.f32 %v1784, %v1853
      %v1886 = vadd.f32 %v1785, %v1854
      %v1887 = vadd.f32 %v1786, %v1855
      %v1888 = vadd.f32 %v1787, %v1856
      %v1889 = vadd.f32 %v1788, %v1857
      %v1890 = vadd.f32 %v1789, %v1858
      %v1891 = vadd.f32 %v1790, %v1859
      %v1892 = vadd.f32 %v1791, %v1860
      %v1893 = vadd.f32 %v1792, %v1861
      %v1894 = vadd.f32 %v1793, %v1862
      %v1895 = vadd.f32 %v1794, %v1863
      %v1896 = vadd.f32 %v1795, %v1864
      %v1897 = vadd.f32 %v1796, %v1865
      %v1898 = vadd.f32 %v1797, %v1866
      %v1899 = vadd.f32 %v1798, %v1867
      %v1900 = vadd.f32 %v1799, %v1868
      %v1901 = vadd.f32 %v1800, %v1869
      %s1902 = scalar_lea.vmem [#allocation4], 32
      %v1903 = vld [vmem:[%s1902] sm:$0xff]
      %v1904 = vld [vmem:[%s1902 + $0x8] sm:$0xff]
      %v1905 = vld [vmem:[%s1902 + $0x10] sm:$0xff]
      %v1906 = vld [vmem:[%s1902 + $0x18] sm:$0xff]
      %v1907 = vld [vmem:[%s1902 + $0x20] sm:$0xff]
      %v1908 = vld [vmem:[%s1902 + $0x28] sm:$0xff]
      %v1909 = vld [vmem:[%s1902 + $0x30] sm:$0xff]
      %v1910 = vld [vmem:[%s1902 + $0x38] sm:$0xff]
      %v1911 = vld [vmem:[%s1902 + $0x40] sm:$0xff]
      %v1912 = vld [vmem:[%s1902 + $0x48] sm:$0xff]
      %v1913 = vld [vmem:[%s1902 + $0x50] sm:$0xff]
      %v1914 = vld [vmem:[%s1902 + $0x58] sm:$0xff]
      %v1915 = vld [vmem:[%s1902 + $0x60] sm:$0xff]
      %v1916 = vld [vmem:[%s1902 + $0x68] sm:$0xff]
      %v1917 = vld [vmem:[%s1902 + $0x70] sm:$0xff]
      %v1918 = vld [vmem:[%s1902 + $0x78] sm:$0xff]
      %v1919 = vld [vmem:[%s1902 + $0x80] sm:$0xff]
      %v1920 = vld [vmem:[%s1902 + $0x88] sm:$0xff]
      %v1921 = vld [vmem:[%s1902 + $0x90] sm:$0xff]
      %v1922 = vld [vmem:[%s1902 + $0x98] sm:$0xff]
      %v1923 = vld [vmem:[%s1902 + $0xa0] sm:$0xff]
      %v1924 = vld [vmem:[%s1902 + $0xa8] sm:$0xff]
      %v1925 = vld [vmem:[%s1902 + $0xb0] sm:$0xff]
      %v1926 = vld [vmem:[%s1902 + $0xb8] sm:$0xff]
      %v1927 = vld [vmem:[%s1902 + $0xc0] sm:$0xff]
      %v1928 = vld [vmem:[%s1902 + $0xc8] sm:$0xff]
      %v1929 = vld [vmem:[%s1902 + $0xd0] sm:$0xff]
      %v1930 = vld [vmem:[%s1902 + $0xd8] sm:$0xff]
      %v1931 = vld [vmem:[%s1902 + $0xe0] sm:$0xff]
      %v1932 = vld [vmem:[%s1902 + $0xe8] sm:$0xff]
      %v1933 = vld [vmem:[%s1902 + $0xf0] sm:$0xff]
      %v1934 = vld [vmem:[%s1902 + $0xf8] sm:$0xff]
      %v1935 = vlaneseq
      %v1936 = vshrl.u32 %v1935, 7
      %v1937 = vsub.s32 0, %v1936
      %v1938 = vrot.slane %v1127, %v1937
      %v1939 = vmul.f32 %v1903, %v1938
      %v1940 = vmul.f32 %v1904, %v1938
      %v1941 = vmul.f32 %v1905, %v1938
      %v1942 = vmul.f32 %v1906, %v1938
      %v1943 = vmul.f32 %v1907, %v1938
      %v1944 = vmul.f32 %v1908, %v1938
      %v1945 = vmul.f32 %v1909, %v1938
      %v1946 = vmul.f32 %v1910, %v1938
      %v1947 = vmul.f32 %v1911, %v1938
      %v1948 = vmul.f32 %v1912, %v1938
      %v1949 = vmul.f32 %v1913, %v1938
      %v1950 = vmul.f32 %v1914, %v1938
      %v1951 = vmul.f32 %v1915, %v1938
      %v1952 = vmul.f32 %v1916, %v1938
      %v1953 = vmul.f32 %v1917, %v1938
      %v1954 = vmul.f32 %v1918, %v1938
      %v1955 = vmul.f32 %v1919, %v1938
      %v1956 = vmul.f32 %v1920, %v1938
      %v1957 = vmul.f32 %v1921, %v1938
      %v1958 = vmul.f32 %v1922, %v1938
      %v1959 = vmul.f32 %v1923, %v1938
      %v1960 = vmul.f32 %v1924, %v1938
      %v1961 = vmul.f32 %v1925, %v1938
      %v1962 = vmul.f32 %v1926, %v1938
      %v1963 = vmul.f32 %v1927, %v1938
      %v1964 = vmul.f32 %v1928, %v1938
      %v1965 = vmul.f32 %v1929, %v1938
      %v1966 = vmul.f32 %v1930, %v1938
      %v1967 = vmul.f32 %v1931, %v1938
      %v1968 = vmul.f32 %v1932, %v1938
      %v1969 = vmul.f32 %v1933, %v1938
      %v1970 = vmul.f32 %v1934, %v1938
      %v1971 = vadd.f32 %v1870, %v1939
      %v1972 = vadd.f32 %v1871, %v1940
      %v1973 = vadd.f32 %v1872, %v1941
      %v1974 = vadd.f32 %v1873, %v1942
      %v1975 = vadd.f32 %v1874, %v1943
      %v1976 = vadd.f32 %v1875, %v1944
      %v1977 = vadd.f32 %v1876, %v1945
      %v1978 = vadd.f32 %v1877, %v1946
      %v1979 = vadd.f32 %v1878, %v1947
      %v1980 = vadd.f32 %v1879, %v1948
      %v1981 = vadd.f32 %v1880, %v1949
      %v1982 = vadd.f32 %v1881, %v1950
      %v1983 = vadd.f32 %v1882, %v1951
      %v1984 = vadd.f32 %v1883, %v1952
      %v1985 = vadd.f32 %v1884, %v1953
      %v1986 = vadd.f32 %v1885, %v1954
      %v1987 = vadd.f32 %v1886, %v1955
      %v1988 = vadd.f32 %v1887, %v1956
      %v1989 = vadd.f32 %v1888, %v1957
      %v1990 = vadd.f32 %v1889, %v1958
      %v1991 = vadd.f32 %v1890, %v1959
      %v1992 = vadd.f32 %v1891, %v1960
      %v1993 = vadd.f32 %v1892, %v1961
      %v1994 = vadd.f32 %v1893, %v1962
      %v1995 = vadd.f32 %v1894, %v1963
      %v1996 = vadd.f32 %v1895, %v1964
      %v1997 = vadd.f32 %v1896, %v1965
      %v1998 = vadd.f32 %v1897, %v1966
      %v1999 = vadd.f32 %v1898, %v1967
      %v2000 = vadd.f32 %v1899, %v1968
      %v2001 = vadd.f32 %v1900, %v1969
      %v2002 = vadd.f32 %v1901, %v1970
      %v2004 = vlaneseq
      %v2005 = vshrl.u32 %v2004, 7
      %v2006 = vsub.s32 0, %v2005
      %v2007 = vrot.slane %v1128, %v2006
      %v2009 = vadd.f32 %v1971, %v2007
      %v2010 = vadd.f32 %v1972, %v2007
      %v2011 = vadd.f32 %v1973, %v2007
      %v2012 = vadd.f32 %v1974, %v2007
      %v2013 = vadd.f32 %v1975, %v2007
      %v2014 = vadd.f32 %v1976, %v2007
      %v2015 = vadd.f32 %v1977, %v2007
      %v2016 = vadd.f32 %v1978, %v2007
      %v2017 = vadd.f32 %v1979, %v2007
      %v2018 = vadd.f32 %v1980, %v2007
      %v2019 = vadd.f32 %v1981, %v2007
      %v2020 = vadd.f32 %v1982, %v2007
      %v2021 = vadd.f32 %v1983, %v2007
      %v2022 = vadd.f32 %v1984, %v2007
      %v2023 = vadd.f32 %v1985, %v2007
      %v2024 = vadd.f32 %v1986, %v2007
      %v2025 = vadd.f32 %v1987, %v2007
      %v2026 = vadd.f32 %v1988, %v2007
      %v2027 = vadd.f32 %v1989, %v2007
      %v2028 = vadd.f32 %v1990, %v2007
      %v2029 = vadd.f32 %v1991, %v2007
      %v2030 = vadd.f32 %v1992, %v2007
      %v2031 = vadd.f32 %v1993, %v2007
      %v2032 = vadd.f32 %v1994, %v2007
      %v2033 = vadd.f32 %v1995, %v2007
      %v2034 = vadd.f32 %v1996, %v2007
      %v2035 = vadd.f32 %v1997, %v2007
      %v2036 = vadd.f32 %v1998, %v2007
      %v2037 = vadd.f32 %v1999, %v2007
      %v2038 = vadd.f32 %v2000, %v2007
      %v2039 = vadd.f32 %v2001, %v2007
      %v2040 = vadd.f32 %v2002, %v2007
      %v2041 = vmax.f32 %v2009, 0.0
      %v2042 = vmax.f32 %v2010, 0.0
      %v2043 = vmax.f32 %v2011, 0.0
      %v2044 = vmax.f32 %v2012, 0.0
      %v2045 = vmax.f32 %v2013, 0.0
      %v2046 = vmax.f32 %v2014, 0.0
      %v2047 = vmax.f32 %v2015, 0.0
      %v2048 = vmax.f32 %v2016, 0.0
      %v2049 = vmax.f32 %v2017, 0.0
      %v2050 = vmax.f32 %v2018, 0.0
      %v2051 = vmax.f32 %v2019, 0.0
      %v2052 = vmax.f32 %v2020, 0.0
      %v2053 = vmax.f32 %v2021, 0.0
      %v2054 = vmax.f32 %v2022, 0.0
      %v2055 = vmax.f32 %v2023, 0.0
      %v2056 = vmax.f32 %v2024, 0.0
      %v2057 = vmax.f32 %v2025, 0.0
      %v2058 = vmax.f32 %v2026, 0.0
      %v2059 = vmax.f32 %v2027, 0.0
      %v2060 = vmax.f32 %v2028, 0.0
      %v2061 = vmax.f32 %v2029, 0.0
      %v2062 = vmax.f32 %v2030, 0.0
      %v2063 = vmax.f32 %v2031, 0.0
      %v2064 = vmax.f32 %v2032, 0.0
      %v2065 = vmax.f32 %v2033, 0.0
      %v2066 = vmax.f32 %v2034, 0.0
      %v2067 = vmax.f32 %v2035, 0.0
      %v2068 = vmax.f32 %v2036, 0.0
      %v2069 = vmax.f32 %v2037, 0.0
      %v2070 = vmax.f32 %v2038, 0.0
      %v2071 = vmax.f32 %v2039, 0.0
      %v2072 = vmax.f32 %v2040, 0.0
      %2073 = vst [vmem:[%s339] sm:$0xff] %v2041
      %2074 = vst [vmem:[%s339 + $0x8] sm:$0xff] %v2042
      %2075 = vst [vmem:[%s339 + $0x10] sm:$0xff] %v2043
      %2076 = vst [vmem:[%s339 + $0x18] sm:$0xff] %v2044
      %2077 = vst [vmem:[%s339 + $0x20] sm:$0xff] %v2045
      %2078 = vst [vmem:[%s339 + $0x28] sm:$0xff] %v2046
      %2079 = vst [vmem:[%s339 + $0x30] sm:$0xff] %v2047
      %2080 = vst [vmem:[%s339 + $0x38] sm:$0xff] %v2048
      %2081 = vst [vmem:[%s339 + $0x40] sm:$0xff] %v2049
      %2082 = vst [vmem:[%s339 + $0x48] sm:$0xff] %v2050
      %2083 = vst [vmem:[%s339 + $0x50] sm:$0xff] %v2051
      %2084 = vst [vmem:[%s339 + $0x58] sm:$0xff] %v2052
      %2085 = vst [vmem:[%s339 + $0x60] sm:$0xff] %v2053
      %2086 = vst [vmem:[%s339 + $0x68] sm:$0xff] %v2054
      %2087 = vst [vmem:[%s339 + $0x70] sm:$0xff] %v2055
      %2088 = vst [vmem:[%s339 + $0x78] sm:$0xff] %v2056
      %2089 = vst [vmem:[%s339 + $0x80] sm:$0xff] %v2057
      %2090 = vst [vmem:[%s339 + $0x88] sm:$0xff] %v2058
      %2091 = vst [vmem:[%s339 + $0x90] sm:$0xff] %v2059
      %2092 = vst [vmem:[%s339 + $0x98] sm:$0xff] %v2060
      %2093 = vst [vmem:[%s339 + $0xa0] sm:$0xff] %v2061
      %2094 = vst [vmem:[%s339 + $0xa8] sm:$0xff] %v2062
      %2095 = vst [vmem:[%s339 + $0xb0] sm:$0xff] %v2063
      %2096 = vst [vmem:[%s339 + $0xb8] sm:$0xff] %v2064
      %2097 = vst [vmem:[%s339 + $0xc0] sm:$0xff] %v2065
      %2098 = vst [vmem:[%s339 + $0xc8] sm:$0xff] %v2066
      %2099 = vst [vmem:[%s339 + $0xd0] sm:$0xff] %v2067
      %2100 = vst [vmem:[%s339 + $0xd8] sm:$0xff] %v2068
      %2101 = vst [vmem:[%s339 + $0xe0] sm:$0xff] %v2069
      %2102 = vst [vmem:[%s339 + $0xe8] sm:$0xff] %v2070
      %2103 = vst [vmem:[%s339 + $0xf0] sm:$0xff] %v2071
      %2104 = vst [vmem:[%s339 + $0xf8] sm:$0xff] %v2072
      %s2105 = smul.u32 16, %s22
      %p2106 = scmp.lt.s32.totalorder %s21, 1
      %s2107 = scalar_select %p2106, %s21, 1
      %p2108 = scmp.lt.s32.totalorder %s2105, 15
      %s2109 = scalar_select %p2108, %s2105, 15
      %p2110 = scmp.lt.s32.totalorder %s23, 0
      %s2111 = scalar_select %p2110, %s23, 0
      %s2112 = smul.addr %s2109, 2
      %s2113 = sadd.s32 %s2111, %s2112
      %s2114 = smul.addr %s2107, 32
      %s2115 = sadd.s32 %s2113, %s2114
      %s2116 = smul.addr %s2115, 8
      %s2117 = scalar_lea.vmem %s5, %s2116
      // Predicated region
      $region49: #{light_conv_bn_act.1} parent=39 // pred_check
        %p2118 = pneg %p189
      $region50: #{light_conv_bn_act.1} parent=39 // pred_check_branch
        %2120 = sbr.rel (%p2118) target = $region52
      $region51: #{light_conv_bn_act.1} parent=39 // pred_region
        %s2121 = smul.u32 16, %s22
      $region52: #{light_conv_bn_act.1} parent=39 // pred_fallthru
        _
    $region40: #{light_conv_bn_act.1} parent=5 // pred_fallthru
      _
    %p2122 = scmp.le.s32.totalorder 2, %s11
    // Predicated region
    $region53: #{light_conv_bn_act.1} parent=5 // pred_check
      %p2123 = pneg %p2122
    $region54: #{light_conv_bn_act.1} parent=5 // pred_check_branch
      %2125 = sbr.rel (%p2123) target = $region56
    $region55: #{light_conv_bn_act.1} parent=5 // pred_region
      %s2126 = ssub.s32 %s11, 2
      // Predicated region
      $region57: #{light_conv_bn_act.1} parent=55 // pred_check
        %p2127 = pneg %p195
      $region58: #{light_conv_bn_act.1} parent=55 // pred_check_branch
        %2129 = sbr.rel (%p2127) target = $region60
      $region59: #{light_conv_bn_act.1} parent=55 // pred_region
        %s2130 = smul.u32 16, %s25
        %p2131 = scmp.lt.s32.totalorder %s24, 1
        %s2132 = scalar_select %p2131, %s24, 1
        %p2133 = scmp.lt.s32.totalorder %s2130, 15
        %s2134 = scalar_select %p2133, %s2130, 15
        %p2135 = scmp.lt.s32.totalorder %s26, 0
        %s2136 = scalar_select %p2135, %s26, 0
        %s2137 = smul.addr %s2134, 2
        %s2138 = sadd.s32 %s2136, %s2137
        %s2139 = smul.addr %s2132, 32
        %s2140 = sadd.s32 %s2138, %s2139
        %s2141 = smul.addr %s2140, 8
        %s2142 = scalar_lea.vmem %s5, %s2141
      $region60: #{light_conv_bn_act.1} parent=55 // pred_fallthru
        _
    $region56: #{light_conv_bn_act.1} parent=5 // pred_fallthru
      _
  $region6: #{light_conv_bn_act.1} parent=0 // loop_footer
    %s15 = sadd.s32 1, %s11
  $region7: #{light_conv_bn_act.1} parent=0 // loop_footer_branch
    %10 = sbr.rel target = $region3
  $region8: #{light_conv_bn_act.1} parent=0 // loop_exit
    _

</llo_original>
